<compile_context>
chip_gen: v7x
topology: tpu7x:2x2x1
jax: 0.10.0
libtpu: 0.0.40
codegen_flags: <defaults>
</compile_context>

<pallas_src>
import functools
import math

import jax
import jax.numpy as jnp
from jax.experimental import pallas as pl
from jax.experimental.pallas import tpu as pltpu


# ----------------------------------------------------------------------------
# Fused kernel: projections + multi-head attention + output projection.
# Grid = (batch, L tiles).  K/V projections run once per batch element
# (l-tile 0) into persistent VMEM scratch; every L tile reuses them.
# ----------------------------------------------------------------------------
def _fused_attention_layer_kernel(
    xq_ref, xk_ref, xv_ref,
    wq_ref, bq_ref, wk_ref, bk_ref, wv_ref, bv_ref, wo_ref, bo_ref,
    out_ref, *rest,
    scale, n_heads, mxu_dtype, output_attention):
  if output_attention:
    attn_ref, k_scr, v_scr = rest
  else:
    attn_ref = None
    k_scr, v_scr = rest

  H = n_heads
  HE = wq_ref.shape[1]
  HDv = wv_ref.shape[1]
  E = HE // H
  Dv = HDv // H
  S = k_scr.shape[0]

  def mx(x):                      # optional bf16 feed for the MXU
    return x if mxu_dtype is None else x.astype(mxu_dtype)

  # ---- K / V projections: once per batch element, kept resident in VMEM
  # scratch and reused by every L tile (grid axis 1 is "arbitrary").
  @pl.when(pl.program_id(1) == 0)
  def _():
    xk = xk_ref[0]                                               # (S, Dm)
    xv = xv_ref[0]                                               # (S, Dm)
    k_scr[...] = (jnp.dot(mx(xk), mx(wk_ref[...]),
                          preferred_element_type=jnp.float32)
                  + bk_ref[...]).astype(k_scr.dtype)             # (S, H*E)
    v_scr[...] = (jnp.dot(mx(xv), mx(wv_ref[...]),
                          preferred_element_type=jnp.float32)
                  + bv_ref[...]).astype(v_scr.dtype)             # (S, H*Dv)

  # ---- Q projection for this L tile: one (Lt, Dm) @ (Dm, H*E) matmul.
  xq = xq_ref[0]                                                 # (Lt, Dm)
  q = jnp.dot(mx(xq), mx(wq_ref[...]),
              preferred_element_type=jnp.float32) + bq_ref[...]  # (Lt, H*E)
  q = q * scale                       # fold 1/sqrt(E) into the small Q tensor
  Lt = q.shape[0]

  # Per-head views for the head-batched attention matmuls (leading batch dim).
  q_h = jnp.transpose(q.reshape(Lt, H, E), (1, 0, 2))            # (H, Lt, E)
  k_h = jnp.transpose(k_scr[...].reshape(S, H, E), (1, 0, 2))    # (H, S, E)
  v_h = jnp.transpose(v_scr[...].reshape(S, H, Dv), (1, 0, 2))   # (H, S, Dv)

  scores = jnp.einsum("hle,hse->hls", mx(q_h), mx(k_h),
                      preferred_element_type=jnp.float32)        # (H, Lt, S)
  m = jnp.max(scores, axis=-1, keepdims=True)
  p = jnp.exp(scores - m)                                        # (H, Lt, S)
  denom = jnp.sum(p, axis=-1, keepdims=True)                     # (H, Lt, 1)

  # Deferred normalization: context from unnormalized p, one (H, Lt, Dv)
  # rescale instead of scaling the (H, Lt, S) probabilities.
  ctx = jnp.einsum("hls,hsf->hlf", mx(p), mx(v_h),
                   preferred_element_type=jnp.float32)           # (H, Lt, Dv)
  ctx = ctx * pl.reciprocal(denom, approx=True)

  # Concat heads lane-major and run the output projection as ONE matmul.
  ctx2 = jnp.transpose(ctx, (1, 0, 2)).reshape(Lt, HDv)          # (Lt, H*Dv)
  out = jnp.dot(mx(ctx2), mx(wo_ref[...]),
                preferred_element_type=jnp.float32) + bo_ref[...]
  out_ref[0] = out.astype(out_ref.dtype)

  if output_attention:
    # Exact divide for the user-visible probabilities (rows sum to 1).
    attn_ref[0] = (p / denom).astype(attn_ref.dtype)


# ----------------------------------------------------------------------------
# Parameters (PyTorch nn.Linear init, stored once in kernel-friendly layouts:
# 2-D, head-fused, pre-transposed so every kernel matmul is x @ W).
# ----------------------------------------------------------------------------
def init_attention_layer_params(key, d_model, n_heads, d_keys=None,
                                d_values=None, dtype=jnp.float32,
                                weight_dtype=None):
  d_keys = d_keys or d_model // n_heads
  d_values = d_values or d_model // n_heads
  ks = jax.random.split(key, 8)

  def linear_init(kw, kb, fan_in, fan_out):
    bound = 1.0 / math.sqrt(fan_in)
    w = jax.random.uniform(kw, (fan_out, fan_in), jnp.float32, -bound, bound)
    b = jax.random.uniform(kb, (fan_out,), jnp.float32, -bound, bound)
    return w, b

  wq, bq = linear_init(ks[0], ks[1], d_model, d_keys * n_heads)
  wk, bk = linear_init(ks[2], ks[3], d_model, d_keys * n_heads)
  wv, bv = linear_init(ks[4], ks[5], d_model, d_values * n_heads)
  wo, bo = linear_init(ks[6], ks[7], d_values * n_heads, d_model)

  wdt = weight_dtype or dtype           # bf16 here on v6e/v7x halves weight VMEM/DMA
  return {
      "wq": wq.T.astype(wdt),               # (Dm, H*E)
      "bq": bq.reshape(1, -1).astype(dtype),
      "wk": wk.T.astype(wdt),               # (Dm, H*E)
      "bk": bk.reshape(1, -1).astype(dtype),
      "wv": wv.T.astype(wdt),               # (Dm, H*Dv)
      "bv": bv.reshape(1, -1).astype(dtype),
      "wo": wo.T.astype(wdt),               # (H*Dv, Dm)
      "bo": bo.reshape(1, -1).astype(dtype),
      "n_heads": n_heads, "d_keys": d_keys, "d_values": d_values,
  }


def _pick_l_tile(L):
  for t in (512, 256, 128, 64):
    if L % t == 0:
      return t
  return L


# ----------------------------------------------------------------------------
# Forward
# ----------------------------------------------------------------------------
def attention_layer_forward(params, queries, keys, values, attn_mask=None,
                            tau=None, delta=None, *,
                            output_attention=True, mxu_dtype=None,
                            l_tile=None):
  """Fused AttentionLayer forward.

  mxu_dtype: jnp.bfloat16 on v6e/v7x feeds the MXU in bf16 while keeping f32
             accumulation and f32 softmax math; None keeps the input dtype
             (recommended on v5e).
  """
  # TODO(synk): attn_mask / tau / delta ignored (unmasked FullAttention);
  #             attention dropout not applied (inference path only).
  B, L, Dm = queries.shape
  _, S, _ = keys.shape
  H = params["n_heads"]
  E = params["d_keys"]
  Dv = params["d_values"]
  HE, HDv = H * E, H * Dv
  scale = 1.0 / math.sqrt(E)

  lt = l_tile or _pick_l_tile(L)
  n_l = pl.cdiv(L, lt)

  kernel = functools.partial(
      _fused_attention_layer_kernel,
      scale=scale, n_heads=H, mxu_dtype=mxu_dtype,
      output_attention=output_attention)

  def resident(shape):                  # weight/bias blocks: same block every step
    n = len(shape)
    return pl.BlockSpec(shape, lambda b, l, _n=n: (0,) * _n)

  in_specs = [
      pl.BlockSpec((1, lt, Dm), lambda b, l: (b, l, 0)),   # queries (L tile)
      pl.BlockSpec((1, S, Dm), lambda b, l: (b, 0, 0)),    # keys (revisited)
      pl.BlockSpec((1, S, Dm), lambda b, l: (b, 0, 0)),    # values (revisited)
      resident((Dm, HE)), resident((1, HE)),               # wq, bq
      resident((Dm, HE)), resident((1, HE)),               # wk, bk
      resident((Dm, HDv)), resident((1, HDv)),             # wv, bv
      resident((HDv, Dm)), resident((1, Dm)),              # wo, bo
  ]

  # NOTE: for tiny models (Dm or S < 128, as in the demo) the output stores
  # are masked partial stores; production d_model >= 128 takes the fast path.
  out_shapes = [jax.ShapeDtypeStruct((B, L, Dm), queries.dtype)]
  out_specs = [pl.BlockSpec((1, lt, Dm), lambda b, l: (b, l, 0))]
  if output_attention:
    out_shapes.append(jax.ShapeDtypeStruct((B, H, L, S), queries.dtype))
    out_specs.append(pl.BlockSpec((1, H, lt, S), lambda b, l: (b, 0, l, 0)))

  scratch_shapes = [
      pltpu.VMEM((S, HE), jnp.float32),    # projected K (reused across L tiles)
      pltpu.VMEM((S, HDv), jnp.float32),   # projected V
  ]

  # ---- VMEM budget from actual block footprints (double-buffered) + headroom.
  act_bytes = jnp.dtype(queries.dtype).itemsize
  w_bytes = jnp.dtype(params["wq"].dtype).itemsize
  est = 0
  est += 2 * act_bytes * (lt * Dm + 2 * S * Dm)                     # inputs x2
  est += 2 * (w_bytes * (2 * Dm * HE + Dm * HDv + HDv * Dm)
              + act_bytes * (2 * HE + HDv + Dm))                    # weights x2
  est += 2 * act_bytes * lt * Dm                                    # out x2
  if output_attention:
    est += 2 * act_bytes * H * lt * S                               # attn x2
  est += 4 * (S * HE + S * HDv)                                     # K/V scratch
  est += 4 * (3 * H * lt * S + 2 * lt * HE + 2 * H * lt * Dv + lt * Dm)  # live temps
  vmem_limit = int(min(max(1.5 * est + (8 << 20), 32 << 20), 64 << 20))

  flops = 2 * B * (L * Dm * HE + S * Dm * HE + S * Dm * HDv
                   + H * L * S * E + H * L * S * Dv + L * HDv * Dm)
  bytes_accessed = (
      act_bytes * (2 * B * L * Dm + 2 * B * S * Dm
                   + (B * H * L * S if output_attention else 0))
      + w_bytes * (2 * Dm * HE + Dm * HDv + HDv * Dm)
      + act_bytes * (2 * HE + HDv + Dm))
  cost = pl.CostEstimate(flops=int(flops),
                         transcendentals=int(B * H * L * S),
                         bytes_accessed=int(bytes_accessed))

  outs = pl.pallas_call(
      kernel,
      grid=(B, n_l),
      in_specs=in_specs,
      out_specs=tuple(out_specs),
      out_shape=tuple(out_shapes),
      scratch_shapes=scratch_shapes,
      compiler_params=pltpu.CompilerParams(
          dimension_semantics=("parallel", "arbitrary"),
          vmem_limit_bytes=vmem_limit),
      cost_estimate=cost,
  )(queries, keys, values,
    params["wq"], params["bq"], params["wk"], params["bk"],
    params["wv"], params["bv"], params["wo"], params["bo"])

  if output_attention:
    return outs[0], outs[1]
  return outs[0], None


# ----------------------------------------------------------------------------
# Pure-JAX reference (same param layout) for correctness checking.
# ----------------------------------------------------------------------------
def _reference_forward(params, queries, keys, values):
  H, E, Dv = params["n_heads"], params["d_keys"], params["d_values"]
  q = queries @ params["wq"].astype(jnp.float32) + params["bq"]
  k = keys @ params["wk"].astype(jnp.float32) + params["bk"]
  v = values @ params["wv"].astype(jnp.float32) + params["bv"]
  B, L, _ = q.shape
  S = k.shape[1]
  qh = q.reshape(B, L, H, E)
  kh = k.reshape(B, S, H, E)
  vh = v.reshape(B, S, H, Dv)
  scores = jnp.einsum("blhe,bshe->bhls", qh, kh) / math.sqrt(E)
  attn = jax.nn.softmax(scores, axis=-1)
  ctx = jnp.einsum("bhls,bshf->blhf", attn, vh).reshape(B, L, H * Dv)
  out = ctx @ params["wo"].astype(jnp.float32) + params["bo"]
  return out, attn


# ----------------------------------------------------------------------------
# Main
# ----------------------------------------------------------------------------
if __name__ == "__main__":
  key = jax.random.PRNGKey(0)
  k_params, k_q, k_k, k_v = jax.random.split(key, 4)

  B, L, S = 2, 8, 8
  d_model, n_heads = 32, 4

  params = init_attention_layer_params(k_params, d_model, n_heads)

  queries = jax.random.normal(k_q, (B, L, d_model), jnp.float32)
  keys = jax.random.normal(k_k, (B, S, d_model), jnp.float32)
  values = jax.random.normal(k_v, (B, S, d_model), jnp.float32)

  out, attn = attention_layer_forward(params, queries, keys, values,
                                      attn_mask=None)
  out = jax.block_until_ready(out)
  attn = jax.block_until_ready(attn)

  assert out.shape == (B, L, d_model), out.shape
  assert attn.shape == (B, n_heads, L, S), attn.shape
  assert bool(jnp.all(jnp.isfinite(out)))
  # exact divide for the returned attention -> rows sum to 1 tightly
  assert bool(jnp.allclose(jnp.sum(attn, axis=-1), 1.0, atol=1e-3))

  # check against a pure-JAX reference
  ref_out, ref_attn = _reference_forward(params, queries, keys, values)
  assert bool(jnp.allclose(out, ref_out, atol=1e-2, rtol=1e-2))
  assert bool(jnp.allclose(attn, ref_attn, atol=1e-2, rtol=1e-2))

  # fast path: attention matrix never materialized or written back
  out2, attn2 = attention_layer_forward(params, queries, keys, values,
                                        attn_mask=None, output_attention=False)
  out2 = jax.block_until_ready(out2)
  assert attn2 is None
  assert bool(jnp.allclose(out2, out, atol=1e-5))

  # bf16 MXU feed (v6e/v7x fast path), f32 accumulation + softmax kept
  out3, _ = attention_layer_forward(params, queries, keys, values,
                                    attn_mask=None, output_attention=False,
                                    mxu_dtype=jnp.bfloat16)
  out3 = jax.block_until_ready(out3)
  assert bool(jnp.allclose(out3, out, atol=5e-2, rtol=5e-2))

  print("KERNEL_OK")
</pallas_src>

<mosaic_0001>
module attributes {stable_mosaic.version = 11 : i64} {
  func.func @_fused_attention_layer_kernel(%arg0: i32, %arg1: i32, %arg2: memref<1x8x32xf32, #tpu.memory_space<vmem>>, %arg3: memref<1x8x32xf32, #tpu.memory_space<vmem>>, %arg4: memref<1x8x32xf32, #tpu.memory_space<vmem>>, %arg5: memref<32x32xf32, #tpu.memory_space<vmem>>, %arg6: memref<1x32xf32, #tpu.memory_space<vmem>>, %arg7: memref<32x32xf32, #tpu.memory_space<vmem>>, %arg8: memref<1x32xf32, #tpu.memory_space<vmem>>, %arg9: memref<32x32xf32, #tpu.memory_space<vmem>>, %arg10: memref<1x32xf32, #tpu.memory_space<vmem>>, %arg11: memref<32x32xf32, #tpu.memory_space<vmem>>, %arg12: memref<1x32xf32, #tpu.memory_space<vmem>>, %arg13: memref<1x8x32xf32, #tpu.memory_space<vmem>>, %arg14: memref<1x4x8x8xf32, #tpu.memory_space<vmem>>, %arg15: memref<8x32xf32, #tpu.memory_space<vmem>>, %arg16: memref<8x32xf32, #tpu.memory_space<vmem>>) attributes {dimension_semantics = [#tpu.dimension_semantics<parallel>, #tpu.dimension_semantics<arbitrary>], iteration_bounds = array<i64: 2, 1>, scalar_prefetch = 0 : i64, scratch_operands = 2 : i64, tpu.core_type = #tpu.core_type<tc>, window_params = [{transform_indices = @transform_0, window_bounds = array<i64: 1, 8, 32>}, {transform_indices = @transform_1, window_bounds = array<i64: 1, 8, 32>}, {transform_indices = @transform_2, window_bounds = array<i64: 1, 8, 32>}, {pipeline_mode = #tpu.pipeline_mode<synchronous>, transform_indices = @transform_3, window_bounds = array<i64: 32, 32>}, {pipeline_mode = #tpu.pipeline_mode<synchronous>, transform_indices = @transform_4, window_bounds = array<i64: 1, 32>}, {pipeline_mode = #tpu.pipeline_mode<synchronous>, transform_indices = @transform_5, window_bounds = array<i64: 32, 32>}, {pipeline_mode = #tpu.pipeline_mode<synchronous>, transform_indices = @transform_6, window_bounds = array<i64: 1, 32>}, {pipeline_mode = #tpu.pipeline_mode<synchronous>, transform_indices = @transform_7, window_bounds = array<i64: 32, 32>}, {pipeline_mode = #tpu.pipeline_mode<synchronous>, transform_indices = @transform_8, window_bounds = array<i64: 1, 32>}, {pipeline_mode = #tpu.pipeline_mode<synchronous>, transform_indices = @transform_9, window_bounds = array<i64: 32, 32>}, {pipeline_mode = #tpu.pipeline_mode<synchronous>, transform_indices = @transform_10, window_bounds = array<i64: 1, 32>}, {transform_indices = @transform_11, window_bounds = array<i64: 1, 8, 32>}, {transform_indices = @transform_12, window_bounds = array<i64: 1, 4, 8, 8>}]} {
    %c0_i32 = arith.constant 0 : i32
    %0 = arith.cmpi eq, %arg1, %c0_i32 : i32
    %1 = arith.extui %0 : i1 to i32
    %c0_i32_0 = arith.constant 0 : i32
    %2 = arith.cmpi ne, %1, %c0_i32_0 : i32
    scf.if %2 {
      %c0_28 = arith.constant 0 : index
      %c0_29 = arith.constant 0 : index
      %c0_30 = arith.constant 0 : index
      %47 = vector.load %arg3[%c0_28, %c0_29, %c0_30] : memref<1x8x32xf32, #tpu.memory_space<vmem>>, vector<1x8x32xf32>
      %48 = vector.shape_cast %47 : vector<1x8x32xf32> to vector<8x32xf32>
      %c0_31 = arith.constant 0 : index
      %c0_32 = arith.constant 0 : index
      %c0_33 = arith.constant 0 : index
      %49 = vector.load %arg4[%c0_31, %c0_32, %c0_33] : memref<1x8x32xf32, #tpu.memory_space<vmem>>, vector<1x8x32xf32>
      %50 = vector.shape_cast %49 : vector<1x8x32xf32> to vector<8x32xf32>
      %c0_34 = arith.constant 0 : index
      %c0_35 = arith.constant 0 : index
      %51 = vector.load %arg7[%c0_34, %c0_35] : memref<32x32xf32, #tpu.memory_space<vmem>>, vector<32x32xf32>
      %cst_36 = arith.constant dense<0.000000e+00> : vector<8x32xf32>
      %52 = tpu.matmul %48, %51, %cst_36 {dimension_numbers = #tpu.dot_dimension_numbers<[1], [0], [0], [1], [0, 0, 1, 1], [], []>} : vector<8x32xf32>, vector<32x32xf32>, vector<8x32xf32> -> vector<8x32xf32>
      %c0_37 = arith.constant 0 : index
      %c0_38 = arith.constant 0 : index
      %53 = vector.load %arg8[%c0_37, %c0_38] : memref<1x32xf32, #tpu.memory_space<vmem>>, vector<1x32xf32>
      %54 = vector.broadcast %53 : vector<1x32xf32> to vector<8x32xf32>
      %55 = arith.addf %52, %54 : vector<8x32xf32>
      %c0_39 = arith.constant 0 : index
      %c0_40 = arith.constant 0 : index
      %56 = vector.load %arg15[%c0_39, %c0_40] : memref<8x32xf32, #tpu.memory_space<vmem>>, vector<8x32xf32>
      tpu.vector_store %arg15[%c0_39, %c0_40], %55 {strides = array<i32>} : memref<8x32xf32, #tpu.memory_space<vmem>>, vector<8x32xf32>,
      %c0_41 = arith.constant 0 : index
      %c0_42 = arith.constant 0 : index
      %57 = vector.load %arg9[%c0_41, %c0_42] : memref<32x32xf32, #tpu.memory_space<vmem>>, vector<32x32xf32>
      %cst_43 = arith.constant dense<0.000000e+00> : vector<8x32xf32>
      %58 = tpu.matmul %50, %57, %cst_43 {dimension_numbers = #tpu.dot_dimension_numbers<[1], [0], [0], [1], [0, 0, 1, 1], [], []>} : vector<8x32xf32>, vector<32x32xf32>, vector<8x32xf32> -> vector<8x32xf32>
      %c0_44 = arith.constant 0 : index
      %c0_45 = arith.constant 0 : index
      %59 = vector.load %arg10[%c0_44, %c0_45] : memref<1x32xf32, #tpu.memory_space<vmem>>, vector<1x32xf32>
      %60 = vector.broadcast %59 : vector<1x32xf32> to vector<8x32xf32>
      %61 = arith.addf %58, %60 : vector<8x32xf32>
      %c0_46 = arith.constant 0 : index
      %c0_47 = arith.constant 0 : index
      %62 = vector.load %arg16[%c0_46, %c0_47] : memref<8x32xf32, #tpu.memory_space<vmem>>, vector<8x32xf32>
      tpu.vector_store %arg16[%c0_46, %c0_47], %61 {strides = array<i32>} : memref<8x32xf32, #tpu.memory_space<vmem>>, vector<8x32xf32>,
    } else {
    }
    %c0 = arith.constant 0 : index
    %c0_1 = arith.constant 0 : index
    %c0_2 = arith.constant 0 : index
    %3 = vector.load %arg2[%c0, %c0_1, %c0_2] : memref<1x8x32xf32, #tpu.memory_space<vmem>>, vector<1x8x32xf32>
    %4 = vector.shape_cast %3 : vector<1x8x32xf32> to vector<8x32xf32>
    %c0_3 = arith.constant 0 : index
    %c0_4 = arith.constant 0 : index
    %5 = vector.load %arg5[%c0_3, %c0_4] : memref<32x32xf32, #tpu.memory_space<vmem>>, vector<32x32xf32>
    %cst = arith.constant dense<0.000000e+00> : vector<8x32xf32>
    %6 = tpu.matmul %4, %5, %cst {dimension_numbers = #tpu.dot_dimension_numbers<[1], [0], [0], [1], [0, 0, 1, 1], [], []>} : vector<8x32xf32>, vector<32x32xf32>, vector<8x32xf32> -> vector<8x32xf32>
    %c0_5 = arith.constant 0 : index
    %c0_6 = arith.constant 0 : index
    %7 = vector.load %arg6[%c0_5, %c0_6] : memref<1x32xf32, #tpu.memory_space<vmem>>, vector<1x32xf32>
    %8 = vector.broadcast %7 : vector<1x32xf32> to vector<8x32xf32>
    %9 = arith.addf %6, %8 : vector<8x32xf32>
    %cst_7 = arith.constant 0.353553385 : f32
    %10 = vector.broadcast %cst_7 : f32 to vector<8x32xf32>
    %11 = arith.mulf %9, %10 : vector<8x32xf32>
    %12 = vector.shape_cast %11 : vector<8x32xf32> to vector<8x4x8xf32>
    %13 = tpu.transpose %12, [1, 0, 2] : vector<8x4x8xf32> -> vector<4x8x8xf32>
    %c0_8 = arith.constant 0 : index
    %c0_9 = arith.constant 0 : index
    %14 = vector.load %arg15[%c0_8, %c0_9] : memref<8x32xf32, #tpu.memory_space<vmem>>, vector<8x32xf32>
    %15 = vector.shape_cast %14 : vector<8x32xf32> to vector<8x4x8xf32>
    %16 = tpu.transpose %15, [1, 0, 2] : vector<8x4x8xf32> -> vector<4x8x8xf32>
    %c0_10 = arith.constant 0 : index
    %c0_11 = arith.constant 0 : index
    %17 = vector.load %arg16[%c0_10, %c0_11] : memref<8x32xf32, #tpu.memory_space<vmem>>, vector<8x32xf32>
    %18 = vector.shape_cast %17 : vector<8x32xf32> to vector<8x4x8xf32>
    %19 = tpu.transpose %18, [1, 0, 2] : vector<8x4x8xf32> -> vector<4x8x8xf32>
    "tpu.trace_start"() <{level = 10 : i32, message = "hle,hse->hls"}> : () -> ()
    %cst_12 = arith.constant dense<0.000000e+00> : vector<4x8x8xf32>
    %20 = tpu.matmul %13, %16, %cst_12 {dimension_numbers = #tpu.dot_dimension_numbers<[2], [2], [1], [1], [0, 0, 0, 1, 1, 1], [0], [0]>} : vector<4x8x8xf32>, vector<4x8x8xf32>, vector<4x8x8xf32> -> vector<4x8x8xf32>
    "tpu.trace_stop"() : () -> ()
    %cst_13 = arith.constant dense<0xFF800000> : vector<4x8xf32>
    %21 = vector.multi_reduction <maximumf>, %20, %cst_13 [2] : vector<4x8x8xf32> to vector<4x8xf32>
    %22 = vector.shape_cast %21 : vector<4x8xf32> to vector<4x8x1xf32>
    %23 = vector.broadcast %22 : vector<4x8x1xf32> to vector<4x8x8xf32>
    %24 = arith.subf %20, %23 : vector<4x8x8xf32>
    %25 = math.exp %24 : vector<4x8x8xf32>
    %cst_14 = arith.constant dense<0.000000e+00> : vector<4x8xf32>
    %26 = vector.multi_reduction <add>, %25, %cst_14 [2] : vector<4x8x8xf32> to vector<4x8xf32>
    %27 = vector.shape_cast %26 : vector<4x8xf32> to vector<4x8x1xf32>
    "tpu.trace_start"() <{level = 10 : i32, message = "hls,hsf->hlf"}> : () -> ()
    %cst_15 = arith.constant dense<0.000000e+00> : vector<4x8x8xf32>
    %28 = tpu.matmul %25, %19, %cst_15 {dimension_numbers = #tpu.dot_dimension_numbers<[2], [1], [1], [2], [0, 0, 0, 1, 1, 2], [0], [0]>} : vector<4x8x8xf32>, vector<4x8x8xf32>, vector<4x8x8xf32> -> vector<4x8x8xf32>
    "tpu.trace_stop"() : () -> ()
    %29 = tpu.reciprocal %27 {approx = true} : vector<4x8x1xf32> -> vector<4x8x1xf32>
    %30 = vector.broadcast %29 : vector<4x8x1xf32> to vector<4x8x8xf32>
    %31 = arith.mulf %28, %30 : vector<4x8x8xf32>
    %32 = tpu.transpose %31, [1, 0, 2] : vector<4x8x8xf32> -> vector<8x4x8xf32>
    %33 = vector.shape_cast %32 : vector<8x4x8xf32> to vector<8x32xf32>
    %c0_16 = arith.constant 0 : index
    %c0_17 = arith.constant 0 : index
    %34 = vector.load %arg11[%c0_16, %c0_17] : memref<32x32xf32, #tpu.memory_space<vmem>>, vector<32x32xf32>
    %cst_18 = arith.constant dense<0.000000e+00> : vector<8x32xf32>
    %35 = tpu.matmul %33, %34, %cst_18 {dimension_numbers = #tpu.dot_dimension_numbers<[1], [0], [0], [1], [0, 0, 1, 1], [], []>} : vector<8x32xf32>, vector<32x32xf32>, vector<8x32xf32> -> vector<8x32xf32>
    %c0_19 = arith.constant 0 : index
    %c0_20 = arith.constant 0 : index
    %36 = vector.load %arg12[%c0_19, %c0_20] : memref<1x32xf32, #tpu.memory_space<vmem>>, vector<1x32xf32>
    %37 = vector.broadcast %36 : vector<1x32xf32> to vector<8x32xf32>
    %38 = arith.addf %35, %37 : vector<8x32xf32>
    %c0_21 = arith.constant 0 : index
    %c0_22 = arith.constant 0 : index
    %c0_23 = arith.constant 0 : index
    %39 = vector.load %arg13[%c0_21, %c0_22, %c0_23] : memref<1x8x32xf32, #tpu.memory_space<vmem>>, vector<1x8x32xf32>
    %40 = vector.shape_cast %39 : vector<1x8x32xf32> to vector<8x32xf32>
    %41 = vector.shape_cast %38 : vector<8x32xf32> to vector<1x8x32xf32>
    tpu.vector_store %arg13[%c0_21, %c0_22, %c0_23], %41 {strides = array<i32>} : memref<1x8x32xf32, #tpu.memory_space<vmem>>, vector<1x8x32xf32>,
    %42 = vector.broadcast %27 : vector<4x8x1xf32> to vector<4x8x8xf32>
    %43 = arith.divf %25, %42 : vector<4x8x8xf32>
    %c0_24 = arith.constant 0 : index
    %c0_25 = arith.constant 0 : index
    %c0_26 = arith.constant 0 : index
    %c0_27 = arith.constant 0 : index
    %44 = vector.load %arg14[%c0_24, %c0_25, %c0_26, %c0_27] : memref<1x4x8x8xf32, #tpu.memory_space<vmem>>, vector<1x4x8x8xf32>
    %45 = vector.shape_cast %44 : vector<1x4x8x8xf32> to vector<4x8x8xf32>
    %46 = vector.shape_cast %43 : vector<4x8x8xf32> to vector<1x4x8x8xf32>
    tpu.vector_store %arg14[%c0_24, %c0_25, %c0_26, %c0_27], %46 {strides = array<i32>} : memref<1x4x8x8xf32, #tpu.memory_space<vmem>>, vector<1x4x8x8xf32>,
    return
  }
  func.func @transform_0(%arg0: i32, %arg1: i32) -> (i32, i32, i32) {
    %c0_i32 = arith.constant 0 : i32
    %c0_i32_0 = arith.constant 0 : i32
    return %arg0, %arg1, %c0_i32 : i32, i32, i32
  }
  func.func @transform_1(%arg0: i32, %arg1: i32) -> (i32, i32, i32) {
    %c0_i32 = arith.constant 0 : i32
    %c0_i32_0 = arith.constant 0 : i32
    %c0_i32_1 = arith.constant 0 : i32
    return %arg0, %c0_i32, %c0_i32_0 : i32, i32, i32
  }
  func.func @transform_2(%arg0: i32, %arg1: i32) -> (i32, i32, i32) {
    %c0_i32 = arith.constant 0 : i32
    %c0_i32_0 = arith.constant 0 : i32
    %c0_i32_1 = arith.constant 0 : i32
    return %arg0, %c0_i32, %c0_i32_0 : i32, i32, i32
  }
  func.func @transform_3(%arg0: i32, %arg1: i32) -> (i32, i32) {
    %c0_i32 = arith.constant 0 : i32
    %c0_i32_0 = arith.constant 0 : i32
    %c0_i32_1 = arith.constant 0 : i32
    return %c0_i32, %c0_i32_0 : i32, i32
  }
  func.func @transform_4(%arg0: i32, %arg1: i32) -> (i32, i32) {
    %c0_i32 = arith.constant 0 : i32
    %c0_i32_0 = arith.constant 0 : i32
    %c0_i32_1 = arith.constant 0 : i32
    return %c0_i32, %c0_i32_0 : i32, i32
  }
  func.func @transform_5(%arg0: i32, %arg1: i32) -> (i32, i32) {
    %c0_i32 = arith.constant 0 : i32
    %c0_i32_0 = arith.constant 0 : i32
    %c0_i32_1 = arith.constant 0 : i32
    return %c0_i32, %c0_i32_0 : i32, i32
  }
  func.func @transform_6(%arg0: i32, %arg1: i32) -> (i32, i32) {
    %c0_i32 = arith.constant 0 : i32
    %c0_i32_0 = arith.constant 0 : i32
    %c0_i32_1 = arith.constant 0 : i32
    return %c0_i32, %c0_i32_0 : i32, i32
  }
  func.func @transform_7(%arg0: i32, %arg1: i32) -> (i32, i32) {
    %c0_i32 = arith.constant 0 : i32
    %c0_i32_0 = arith.constant 0 : i32
    %c0_i32_1 = arith.constant 0 : i32
    return %c0_i32, %c0_i32_0 : i32, i32
  }
  func.func @transform_8(%arg0: i32, %arg1: i32) -> (i32, i32) {
    %c0_i32 = arith.constant 0 : i32
    %c0_i32_0 = arith.constant 0 : i32
    %c0_i32_1 = arith.constant 0 : i32
    return %c0_i32, %c0_i32_0 : i32, i32
  }
  func.func @transform_9(%arg0: i32, %arg1: i32) -> (i32, i32) {
    %c0_i32 = arith.constant 0 : i32
    %c0_i32_0 = arith.constant 0 : i32
    %c0_i32_1 = arith.constant 0 : i32
    return %c0_i32, %c0_i32_0 : i32, i32
  }
  func.func @transform_10(%arg0: i32, %arg1: i32) -> (i32, i32) {
    %c0_i32 = arith.constant 0 : i32
    %c0_i32_0 = arith.constant 0 : i32
    %c0_i32_1 = arith.constant 0 : i32
    return %c0_i32, %c0_i32_0 : i32, i32
  }
  func.func @transform_11(%arg0: i32, %arg1: i32) -> (i32, i32, i32) {
    %c0_i32 = arith.constant 0 : i32
    %c0_i32_0 = arith.constant 0 : i32
    return %arg0, %arg1, %c0_i32 : i32, i32, i32
  }
  func.func @transform_12(%arg0: i32, %arg1: i32) -> (i32, i32, i32, i32) {
    %c0_i32 = arith.constant 0 : i32
    %c0_i32_0 = arith.constant 0 : i32
    %c0_i32_1 = arith.constant 0 : i32
    return %arg0, %c0_i32, %arg1, %c0_i32_0 : i32, i32, i32, i32
  }
}

</mosaic_0001>

<llo_original>
// kernel: tpu_custom_call.1
$region0: #{tpu_custom_call.1}
  #allocation0 [shape = 'u32[]', space=smem, size = 0x4, offset = 0x4, fixed_abs, tag = 'smem constant byte address 0x4 - core index']
  #allocation1 [shape = 'u32[144,128]{1,0:T(1,128)}', space=vmem, size = 0x12000, scoped, tag = 'internal scratch']
  #allocation2 [shape = 'f32[8,32]{1,0:T(8,128)}', space=vmem, size = 0x1000, scoped, tag = 'scratch operand']
  #allocation3 [shape = 'f32[8,32]{1,0:T(8,128)}', space=vmem, size = 0x1000, scoped, tag = 'scratch operand']
  %s0 = inlined_call_operand.hbm [shape: f32[2,8,32], index: 0, kind: input, shape index: {}]
  %s1 = inlined_call_operand.hbm [shape: f32[2,8,32], index: 1, kind: input, shape index: {}]
  %s2 = inlined_call_operand.hbm [shape: f32[2,8,32], index: 2, kind: input, shape index: {}]
  %s3 = inlined_call_operand.hbm [shape: f32[32,32], index: 3, kind: input, shape index: {}]
  %s4 = inlined_call_operand.vmem [shape: f32[1,32], index: 4, kind: input, shape index: {}]
  %s5 = inlined_call_operand.hbm [shape: f32[32,32], index: 5, kind: input, shape index: {}]
  %s6 = inlined_call_operand.vmem [shape: f32[1,32], index: 6, kind: input, shape index: {}]
  %s7 = inlined_call_operand.hbm [shape: f32[32,32], index: 7, kind: input, shape index: {}]
  %s8 = inlined_call_operand.hbm [shape: f32[1,32], index: 8, kind: input, shape index: {}]
  %s9 = inlined_call_operand.vmem [shape: f32[32,32], index: 9, kind: input, shape index: {}]
  %s10 = inlined_call_operand.vmem [shape: f32[1,32], index: 10, kind: input, shape index: {}]
  %s11 = inlined_call_operand.hbm [shape: f32[2,8,32], index: 11, kind: output, shape index: {0}]
  %s12 = inlined_call_operand.hbm [shape: f32[2,4,8,8], index: 12, kind: output, shape index: {1}]
  %13 = xla_tuple %s11, %s12
  %s14 = sld [smem:[#allocation0]]
  $region117: #{tpu_custom_call.1} parent=0
    _
  %s16 = ssub.s32 1, %s14
  %s17 = scalar_select 0, %s16, %s14
  $region1: #{tpu_custom_call.1} parent=0
    #allocation4 [shape = 'u8[8192]{0}', space=vmem, size = 0x2000, scoped, tag = 'input window, operand 0']
    #allocation5 [shape = 's32[2]{0}', space=sflag, size = 0x8, scoped, tag = 'scoped memory for tpu_custom_call.1']
    #allocation6 [shape = 's32[2]{0}', space=sflag, size = 0x8, scoped, tag = 'scoped memory for tpu_custom_call.1']
    #allocation7 [shape = 'u8[8192]{0}', space=vmem, size = 0x2000, scoped, tag = 'input window, operand 1']
    #allocation8 [shape = 's32[2]{0}', space=sflag, size = 0x8, scoped, tag = 'scoped memory for tpu_custom_call.1']
    #allocation9 [shape = 'u8[8192]{0}', space=vmem, size = 0x2000, scoped, tag = 'input window, operand 2']
    #allocation10 [shape = 'u8[16384]{0}', space=vmem, size = 0x4000, scoped, tag = 'input window, operand 3, single buffered']
    #allocation11 [shape = 's32[1]{0}', space=sflag, size = 0x4, scoped, tag = 'scoped memory for tpu_custom_call.1']
    #allocation12 [shape = 'u8[16384]{0}', space=vmem, size = 0x4000, scoped, tag = 'input window, operand 5, single buffered']
    #allocation13 [shape = 'u8[16384]{0}', space=vmem, size = 0x4000, scoped, tag = 'input window, operand 7, single buffered']
    #allocation14 [shape = 's32[1]{0}', space=sflag, size = 0x4, scoped, tag = 'scoped memory for tpu_custom_call.1']
    #allocation15 [shape = 'u8[512]{0}', space=vmem, size = 0x400, scoped, tag = 'input window, operand 8, single buffered']
    #allocation16 [shape = 'u8[8192]{0}', space=vmem, size = 0x2000, scoped, tag = 'output window, operand 0']
    #allocation17 [shape = 'u8[32768]{0}', space=vmem, size = 0x8000, scoped, tag = 'output window, operand 1']
    #allocation18 [shape = 's32[2]{0}', space=sflag, size = 0x8, scoped, tag = 'scoped memory for tpu_custom_call.1']
    %18 = vsyncpa [#allocation5], 0
    %s19 = scalar_lea.sflag [#allocation5], 1
    %20 = vsyncpa %s19, 0
    %21 = vsyncpa [#allocation8], 0
    %s22 = scalar_lea.sflag [#allocation8], 1
    %23 = vsyncpa %s22, 0
    %24 = vsyncpa [#allocation11], 0
    %25 = vsyncpa [#allocation14], 0
    %26 = vsyncpa [#allocation6], 0
    %s27 = scalar_lea.sflag [#allocation6], 1
    %28 = vsyncpa %s27, 0
    %29 = vsyncpa [#allocation18], 0
    %s30 = scalar_lea.sflag [#allocation18], 1
    %31 = vsyncpa %s30, 0
    loop: start=0, step=1, limit=4
    $region2: #{tpu_custom_call.1} parent=1 // loop_pre_header
      _
    $region3: #{tpu_custom_call.1} parent=1 // loop_header
      %s33 = sphi 0, %s37
      %p34 = scmp.ge.s32.totalorder %s33, 4
      %s40 = sphi 0, %s52
      %s41 = sphi 0, %s48
      %s42 = sphi 0, %s40
      %s43 = sphi 0, %s41
      %s44 = sphi 0, %s42
      %s45 = sphi 0, %s43
      %s57 = sphi 0, %s59
      %s60 = sphi 0, %s57
      %s61 = sphi 0, %s60
      %s77 = sphi 0, %s61
      %s83 = sphi 0, %s85
      %s86 = sphi 0, %s83
      %s87 = sphi 0, %s86
      %s103 = sphi 0, %s87
      %s109 = sphi 0, %s111
      %s112 = sphi 0, %s109
      %s113 = sphi 0, %s112
      %s129 = sphi 0, %s113
      %s133 = sphi 0, %s133
      %s135 = sphi 0, %s133
      %s136 = sphi 0, %s135
      %s150 = sphi 0, %s136
      %s154 = sphi 0, %s154
      %s156 = sphi 0, %s154
      %s157 = sphi 0, %s156
      %s171 = sphi 0, %s157
      %s175 = sphi 0, %s175
      %s177 = sphi 0, %s175
      %s178 = sphi 0, %s177
      %s192 = sphi 0, %s178
      %s196 = sphi 0, %s196
      %s198 = sphi 0, %s196
      %s199 = sphi 0, %s198
      %s213 = sphi 0, %s199
      %s217 = sphi 0, %s217
      %s219 = sphi 0, %s217
      %s220 = sphi 0, %s219
      %s234 = sphi 0, %s220
      %s238 = sphi 0, %s238
      %s240 = sphi 0, %s238
      %s241 = sphi 0, %s240
      %s255 = sphi 0, %s241
      %s259 = sphi 0, %s259
      %s261 = sphi 0, %s259
      %s262 = sphi 0, %s261
      %s276 = sphi 0, %s262
      %s280 = sphi 0, %s280
      %s282 = sphi 0, %s280
      %s283 = sphi 0, %s282
      %s297 = sphi 0, %s283
      %s305 = sphi 0, %s307
      %s308 = sphi 0, %s305
      %s309 = sphi 0, %s308
      %s325 = sphi 0, %s309
      %s333 = sphi 0, %s335
      %s336 = sphi 0, %s333
      %s337 = sphi 0, %s336
      %s353 = sphi 0, %s337
    $region4: #{tpu_custom_call.1} parent=1 // loop_header_branch
      %36 = sbr.rel (%p34) target = $region8
    $region5: #{tpu_custom_call.1} parent=1 // loop_body
      %s38 = ssub.s32 %s33, 1
      %s39 = ssub.s32 %s33, 2
      %s46 = sadd.s32 1, %s41
      %p47 = scmp.ge.s32.totalorder %s46, 1
      %s48 = scalar_select %p47, 0, %s46
      %s49 = sadd.s32 1, %s40
      %s50 = scalar_select %p47, %s49, %s40
      %p51 = scmp.ge.s32.totalorder %s50, 2
      %s52 = scalar_select %p51, 0, %s50
      %s53 = ssub.s32 %s40, %s52
      %s54 = ssub.s32 %s41, %s48
      %s55 = sor.u32 %s53, %s54
      %p56 = scmp.eq.s32.totalorder %s55, 0
      %s58 = sadd.s32 %s57, 1
      %s59 = scalar_select %p56, %s57, %s58
      %p62 = pneg %p56
      %p63 = scmp.eq.s32.totalorder %s33, 1
      %p64 = por %p62, %p63
      %p65 = scmp.ne.s32.totalorder %s57, %s60
      %p66 = scmp.eq.s32.totalorder %s33, 0
      %p67 = por %p65, %p66
      %p68 = scmp.ne.s32.totalorder %s57, %s60
      %p69 = scmp.eq.s32.totalorder %s38, 1
      %p70 = por %p68, %p69
      %p71 = scmp.ne.s32.totalorder %s60, %s61
      %p72 = scmp.eq.s32.totalorder %s38, 0
      %p73 = por %p71, %p72
      %p74 = scmp.ne.s32.totalorder %s60, %s61
      %p75 = scmp.eq.s32.totalorder %s39, 1
      %p76 = por %p74, %p75
      %p78 = scmp.ne.s32.totalorder %s61, %s77
      %p79 = scmp.eq.s32.totalorder %s39, 0
      %p80 = por %p78, %p79
      %s81 = ssub.s32 %s40, %s52
      %p82 = scmp.eq.s32.totalorder %s81, 0
      %s84 = sadd.s32 %s83, 1
      %s85 = scalar_select %p82, %s83, %s84
      %p88 = pneg %p82
      %p89 = scmp.eq.s32.totalorder %s33, 1
      %p90 = por %p88, %p89
      %p91 = scmp.ne.s32.totalorder %s83, %s86
      %p92 = scmp.eq.s32.totalorder %s33, 0
      %p93 = por %p91, %p92
      %p94 = scmp.ne.s32.totalorder %s83, %s86
      %p95 = scmp.eq.s32.totalorder %s38, 1
      %p96 = por %p94, %p95
      %p97 = scmp.ne.s32.totalorder %s86, %s87
      %p98 = scmp.eq.s32.totalorder %s38, 0
      %p99 = por %p97, %p98
      %p100 = scmp.ne.s32.totalorder %s86, %s87
      %p101 = scmp.eq.s32.totalorder %s39, 1
      %p102 = por %p100, %p101
      %p104 = scmp.ne.s32.totalorder %s87, %s103
      %p105 = scmp.eq.s32.totalorder %s39, 0
      %p106 = por %p104, %p105
      %s107 = ssub.s32 %s40, %s52
      %p108 = scmp.eq.s32.totalorder %s107, 0
      %s110 = sadd.s32 %s109, 1
      %s111 = scalar_select %p108, %s109, %s110
      %p114 = pneg %p108
      %p115 = scmp.eq.s32.totalorder %s33, 1
      %p116 = por %p114, %p115
      %p117 = scmp.ne.s32.totalorder %s109, %s112
      %p118 = scmp.eq.s32.totalorder %s33, 0
      %p119 = por %p117, %p118
      %p120 = scmp.ne.s32.totalorder %s109, %s112
      %p121 = scmp.eq.s32.totalorder %s38, 1
      %p122 = por %p120, %p121
      %p123 = scmp.ne.s32.totalorder %s112, %s113
      %p124 = scmp.eq.s32.totalorder %s38, 0
      %p125 = por %p123, %p124
      %p126 = scmp.ne.s32.totalorder %s112, %s113
      %p127 = scmp.eq.s32.totalorder %s39, 1
      %p128 = por %p126, %p127
      %p130 = scmp.ne.s32.totalorder %s113, %s129
      %p131 = scmp.eq.s32.totalorder %s39, 0
      %p132 = por %p130, %p131
      %s134 = sadd.s32 %s133, 1
      %p137 = scmp.eq.s32.totalorder %s33, 1
      %p138 = scmp.ne.s32.totalorder %s133, %s135
      %p139 = scmp.eq.s32.totalorder %s33, 0
      %p140 = por %p138, %p139
      %p141 = scmp.ne.s32.totalorder %s133, %s135
      %p142 = scmp.eq.s32.totalorder %s38, 1
      %p143 = por %p141, %p142
      %p144 = scmp.ne.s32.totalorder %s135, %s136
      %p145 = scmp.eq.s32.totalorder %s38, 0
      %p146 = por %p144, %p145
      %p147 = scmp.ne.s32.totalorder %s135, %s136
      %p148 = scmp.eq.s32.totalorder %s39, 1
      %p149 = por %p147, %p148
      %p151 = scmp.ne.s32.totalorder %s136, %s150
      %p152 = scmp.eq.s32.totalorder %s39, 0
      %p153 = por %p151, %p152
      %s155 = sadd.s32 %s154, 1
      %p158 = scmp.eq.s32.totalorder %s33, 1
      %p159 = scmp.ne.s32.totalorder %s154, %s156
      %p160 = scmp.eq.s32.totalorder %s33, 0
      %p161 = por %p159, %p160
      %p162 = scmp.ne.s32.totalorder %s154, %s156
      %p163 = scmp.eq.s32.totalorder %s38, 1
      %p164 = por %p162, %p163
      %p165 = scmp.ne.s32.totalorder %s156, %s157
      %p166 = scmp.eq.s32.totalorder %s38, 0
      %p167 = por %p165, %p166
      %p168 = scmp.ne.s32.totalorder %s156, %s157
      %p169 = scmp.eq.s32.totalorder %s39, 1
      %p170 = por %p168, %p169
      %p172 = scmp.ne.s32.totalorder %s157, %s171
      %p173 = scmp.eq.s32.totalorder %s39, 0
      %p174 = por %p172, %p173
      %s176 = sadd.s32 %s175, 1
      %p179 = scmp.eq.s32.totalorder %s33, 1
      %p180 = scmp.ne.s32.totalorder %s175, %s177
      %p181 = scmp.eq.s32.totalorder %s33, 0
      %p182 = por %p180, %p181
      %p183 = scmp.ne.s32.totalorder %s175, %s177
      %p184 = scmp.eq.s32.totalorder %s38, 1
      %p185 = por %p183, %p184
      %p186 = scmp.ne.s32.totalorder %s177, %s178
      %p187 = scmp.eq.s32.totalorder %s38, 0
      %p188 = por %p186, %p187
      %p189 = scmp.ne.s32.totalorder %s177, %s178
      %p190 = scmp.eq.s32.totalorder %s39, 1
      %p191 = por %p189, %p190
      %p193 = scmp.ne.s32.totalorder %s178, %s192
      %p194 = scmp.eq.s32.totalorder %s39, 0
      %p195 = por %p193, %p194
      %s197 = sadd.s32 %s196, 1
      %p200 = scmp.eq.s32.totalorder %s33, 1
      %p201 = scmp.ne.s32.totalorder %s196, %s198
      %p202 = scmp.eq.s32.totalorder %s33, 0
      %p203 = por %p201, %p202
      %p204 = scmp.ne.s32.totalorder %s196, %s198
      %p205 = scmp.eq.s32.totalorder %s38, 1
      %p206 = por %p204, %p205
      %p207 = scmp.ne.s32.totalorder %s198, %s199
      %p208 = scmp.eq.s32.totalorder %s38, 0
      %p209 = por %p207, %p208
      %p210 = scmp.ne.s32.totalorder %s198, %s199
      %p211 = scmp.eq.s32.totalorder %s39, 1
      %p212 = por %p210, %p211
      %p214 = scmp.ne.s32.totalorder %s199, %s213
      %p215 = scmp.eq.s32.totalorder %s39, 0
      %p216 = por %p214, %p215
      %s218 = sadd.s32 %s217, 1
      %p221 = scmp.eq.s32.totalorder %s33, 1
      %p222 = scmp.ne.s32.totalorder %s217, %s219
      %p223 = scmp.eq.s32.totalorder %s33, 0
      %p224 = por %p222, %p223
      %p225 = scmp.ne.s32.totalorder %s217, %s219
      %p226 = scmp.eq.s32.totalorder %s38, 1
      %p227 = por %p225, %p226
      %p228 = scmp.ne.s32.totalorder %s219, %s220
      %p229 = scmp.eq.s32.totalorder %s38, 0
      %p230 = por %p228, %p229
      %p231 = scmp.ne.s32.totalorder %s219, %s220
      %p232 = scmp.eq.s32.totalorder %s39, 1
      %p233 = por %p231, %p232
      %p235 = scmp.ne.s32.totalorder %s220, %s234
      %p236 = scmp.eq.s32.totalorder %s39, 0
      %p237 = por %p235, %p236
      %s239 = sadd.s32 %s238, 1
      %p242 = scmp.eq.s32.totalorder %s33, 1
      %p243 = scmp.ne.s32.totalorder %s238, %s240
      %p244 = scmp.eq.s32.totalorder %s33, 0
      %p245 = por %p243, %p244
      %p246 = scmp.ne.s32.totalorder %s238, %s240
      %p247 = scmp.eq.s32.totalorder %s38, 1
      %p248 = por %p246, %p247
      %p249 = scmp.ne.s32.totalorder %s240, %s241
      %p250 = scmp.eq.s32.totalorder %s38, 0
      %p251 = por %p249, %p250
      %p252 = scmp.ne.s32.totalorder %s240, %s241
      %p253 = scmp.eq.s32.totalorder %s39, 1
      %p254 = por %p252, %p253
      %p256 = scmp.ne.s32.totalorder %s241, %s255
      %p257 = scmp.eq.s32.totalorder %s39, 0
      %p258 = por %p256, %p257
      %s260 = sadd.s32 %s259, 1
      %p263 = scmp.eq.s32.totalorder %s33, 1
      %p264 = scmp.ne.s32.totalorder %s259, %s261
      %p265 = scmp.eq.s32.totalorder %s33, 0
      %p266 = por %p264, %p265
      %p267 = scmp.ne.s32.totalorder %s259, %s261
      %p268 = scmp.eq.s32.totalorder %s38, 1
      %p269 = por %p267, %p268
      %p270 = scmp.ne.s32.totalorder %s261, %s262
      %p271 = scmp.eq.s32.totalorder %s38, 0
      %p272 = por %p270, %p271
      %p273 = scmp.ne.s32.totalorder %s261, %s262
      %p274 = scmp.eq.s32.totalorder %s39, 1
      %p275 = por %p273, %p274
      %p277 = scmp.ne.s32.totalorder %s262, %s276
      %p278 = scmp.eq.s32.totalorder %s39, 0
      %p279 = por %p277, %p278
      %s281 = sadd.s32 %s280, 1
      %p284 = scmp.eq.s32.totalorder %s33, 1
      %p285 = scmp.ne.s32.totalorder %s280, %s282
      %p286 = scmp.eq.s32.totalorder %s33, 0
      %p287 = por %p285, %p286
      %p288 = scmp.ne.s32.totalorder %s280, %s282
      %p289 = scmp.eq.s32.totalorder %s38, 1
      %p290 = por %p288, %p289
      %p291 = scmp.ne.s32.totalorder %s282, %s283
      %p292 = scmp.eq.s32.totalorder %s38, 0
      %p293 = por %p291, %p292
      %p294 = scmp.ne.s32.totalorder %s282, %s283
      %p295 = scmp.eq.s32.totalorder %s39, 1
      %p296 = por %p294, %p295
      %p298 = scmp.ne.s32.totalorder %s283, %s297
      %p299 = scmp.eq.s32.totalorder %s39, 0
      %p300 = por %p298, %p299
      %s301 = ssub.s32 %s40, %s52
      %s302 = ssub.s32 %s41, %s48
      %s303 = sor.u32 %s301, %s302
      %p304 = scmp.eq.s32.totalorder %s303, 0
      %s306 = sadd.s32 %s305, 1
      %s307 = scalar_select %p304, %s305, %s306
      %p310 = pneg %p304
      %p311 = scmp.eq.s32.totalorder %s33, 1
      %p312 = por %p310, %p311
      %p313 = scmp.ne.s32.totalorder %s305, %s308
      %p314 = scmp.eq.s32.totalorder %s33, 0
      %p315 = por %p313, %p314
      %p316 = scmp.ne.s32.totalorder %s305, %s308
      %p317 = scmp.eq.s32.totalorder %s38, 1
      %p318 = por %p316, %p317
      %p319 = scmp.ne.s32.totalorder %s308, %s309
      %p320 = scmp.eq.s32.totalorder %s38, 0
      %p321 = por %p319, %p320
      %p322 = scmp.ne.s32.totalorder %s308, %s309
      %p323 = scmp.eq.s32.totalorder %s39, 1
      %p324 = por %p322, %p323
      %p326 = scmp.ne.s32.totalorder %s309, %s325
      %p327 = scmp.eq.s32.totalorder %s39, 0
      %p328 = por %p326, %p327
      %s329 = ssub.s32 %s40, %s52
      %s330 = ssub.s32 %s41, %s48
      %s331 = sor.u32 %s329, %s330
      %p332 = scmp.eq.s32.totalorder %s331, 0
      %s334 = sadd.s32 %s333, 1
      %s335 = scalar_select %p332, %s333, %s334
      %p338 = pneg %p332
      %p339 = scmp.eq.s32.totalorder %s33, 1
      %p340 = por %p338, %p339
      %p341 = scmp.ne.s32.totalorder %s333, %s336
      %p342 = scmp.eq.s32.totalorder %s33, 0
      %p343 = por %p341, %p342
      %p344 = scmp.ne.s32.totalorder %s333, %s336
      %p345 = scmp.eq.s32.totalorder %s38, 1
      %p346 = por %p344, %p345
      %p347 = scmp.ne.s32.totalorder %s336, %s337
      %p348 = scmp.eq.s32.totalorder %s38, 0
      %p349 = por %p347, %p348
      %p350 = scmp.ne.s32.totalorder %s336, %s337
      %p351 = scmp.eq.s32.totalorder %s39, 1
      %p352 = por %p350, %p351
      %p354 = scmp.ne.s32.totalorder %s337, %s353
      %p355 = scmp.eq.s32.totalorder %s39, 0
      %p356 = por %p354, %p355
      %p357 = scmp.le.s32.totalorder 1, %s33
      %p358 = scmp.lt.s32.totalorder %s33, 3
      %p359 = pnand %p357, %p358
      %p360 = pneg %p359
      // Predicated region
      $region9: #{tpu_custom_call.1} parent=5 // pred_check
        _
      $region10: #{tpu_custom_call.1} parent=5 // pred_check_branch
        %362 = sbr.rel (%p359) target = $region12
      $region11: #{tpu_custom_call.1} parent=5 // pred_region
        %s363 = ssub.s32 %s33, 1
        // Predicated region
        $region13: #{tpu_custom_call.1} parent=11 // pred_check
          %p364 = pneg %p146
        $region14: #{tpu_custom_call.1} parent=11 // pred_check_branch
          %366 = sbr.rel (%p364) target = $region16
        $region15: #{tpu_custom_call.1} parent=11 // pred_region
          %s368 = ssub.s32 512, 512
          %369 = vsyncadd [#allocation11], %s368
          %s370 = sshll.u32 [#allocation10], 4
          %s371 = int_to_ptr.vmem [resolvable:$true] %s370
          %376 = dma.hbm_to_vmem [thread:$0]  %s3, 512, %s371, [#allocation11], 128, 128, 8
        $region16: #{tpu_custom_call.1} parent=11 // pred_fallthru
          _
        // Predicated region
        $region17: #{tpu_custom_call.1} parent=11 // pred_check
          %p377 = pneg %p167
        $region18: #{tpu_custom_call.1} parent=11 // pred_check_branch
          %379 = sbr.rel (%p377) target = $region20
        $region19: #{tpu_custom_call.1} parent=11 // pred_region
          _
        $region20: #{tpu_custom_call.1} parent=11 // pred_fallthru
          _
        // Predicated region
        $region21: #{tpu_custom_call.1} parent=11 // pred_check
          %p380 = pneg %p188
        $region22: #{tpu_custom_call.1} parent=11 // pred_check_branch
          %382 = sbr.rel (%p380) target = $region24
        $region23: #{tpu_custom_call.1} parent=11 // pred_region
          %s384 = ssub.s32 512, 512
          %385 = vsyncadd [#allocation11], %s384
          %s386 = sshll.u32 [#allocation12], 4
          %s387 = int_to_ptr.vmem [resolvable:$true] %s386
          %392 = dma.hbm_to_vmem [thread:$0]  %s5, 512, %s387, [#allocation11], 128, 128, 8
        $region24: #{tpu_custom_call.1} parent=11 // pred_fallthru
          _
        // Predicated region
        $region25: #{tpu_custom_call.1} parent=11 // pred_check
          %p393 = pneg %p209
        $region26: #{tpu_custom_call.1} parent=11 // pred_check_branch
          %395 = sbr.rel (%p393) target = $region28
        $region27: #{tpu_custom_call.1} parent=11 // pred_region
          _
        $region28: #{tpu_custom_call.1} parent=11 // pred_fallthru
          _
        // Predicated region
        $region29: #{tpu_custom_call.1} parent=11 // pred_check
          %p396 = pneg %p230
        $region30: #{tpu_custom_call.1} parent=11 // pred_check_branch
          %398 = sbr.rel (%p396) target = $region32
        $region31: #{tpu_custom_call.1} parent=11 // pred_region
          %s400 = ssub.s32 512, 512
          %401 = vsyncadd [#allocation14], %s400
          %s402 = sshll.u32 [#allocation13], 4
          %s403 = int_to_ptr.vmem [resolvable:$true] %s402
          %408 = dma.hbm_to_vmem [thread:$0]  %s7, 512, %s403, [#allocation14], 128, 128, 8
        $region32: #{tpu_custom_call.1} parent=11 // pred_fallthru
          _
        // Predicated region
        $region33: #{tpu_custom_call.1} parent=11 // pred_check
          %p409 = pneg %p251
        $region34: #{tpu_custom_call.1} parent=11 // pred_check_branch
          %411 = sbr.rel (%p409) target = $region36
        $region35: #{tpu_custom_call.1} parent=11 // pred_region
          %s413 = ssub.s32 16, 16
          %414 = vsyncadd [#allocation14], %s413
          %s416 = sshll.u32 [#allocation15], 4
          %s417 = int_to_ptr.vmem [resolvable:$true] %s416
          %419 = dma.hbm_to_vmem [thread:$0]  %s8, 16, %s417, [#allocation14]
        $region36: #{tpu_custom_call.1} parent=11 // pred_fallthru
          _
        // Predicated region
        $region37: #{tpu_custom_call.1} parent=11 // pred_check
          %p420 = pneg %p272
        $region38: #{tpu_custom_call.1} parent=11 // pred_check_branch
          %422 = sbr.rel (%p420) target = $region40
        $region39: #{tpu_custom_call.1} parent=11 // pred_region
          _
        $region40: #{tpu_custom_call.1} parent=11 // pred_fallthru
          _
        // Predicated region
        $region41: #{tpu_custom_call.1} parent=11 // pred_check
          %p423 = pneg %p293
        $region42: #{tpu_custom_call.1} parent=11 // pred_check_branch
          %425 = sbr.rel (%p423) target = $region44
        $region43: #{tpu_custom_call.1} parent=11 // pred_region
          _
        $region44: #{tpu_custom_call.1} parent=11 // pred_fallthru
          _
      $region12: #{tpu_custom_call.1} parent=5 // pred_fallthru
        _
      %p426 = scmp.lt.s32.totalorder %s33, 2
      // Predicated region
      $region45: #{tpu_custom_call.1} parent=5 // pred_check
        %p427 = pneg %p426
      $region46: #{tpu_custom_call.1} parent=5 // pred_check_branch
        %429 = sbr.rel (%p427) target = $region48
      $region47: #{tpu_custom_call.1} parent=5 // pred_region
        // Predicated region
        $region49: #{tpu_custom_call.1} parent=47 // pred_check
          %p430 = pneg %p67
        $region50: #{tpu_custom_call.1} parent=47 // pred_check_branch
          %432 = sbr.rel (%p430) target = $region52
        $region51: #{tpu_custom_call.1} parent=47 // pred_region
          %s433 = sand.u32 %s57, 1
          %s434 = scalar_lea.sflag [#allocation5], %s433
          %s435 = sand.u32 %s57, 1
          %s436 = smul.addr %s435, 8
          %s437 = scalar_lea.vmem [#allocation4], %s436
          %s439 = ssub.s32 128, 128
          %440 = vsyncadd %s434, %s439
          %s441 = sadd.s32 %s41, %s40
          %s442 = smul.addr %s441, 128
          %s443 = scalar_lea.hbm %s0, %s442
          %s445 = sshll.u32 %s437, 4
          %s446 = int_to_ptr.vmem [resolvable:$true] %s445
          %448 = dma.hbm_to_vmem [thread:$0]  %s443, 128, %s446, %s434
        $region52: #{tpu_custom_call.1} parent=47 // pred_fallthru
          _
        // Predicated region
        $region53: #{tpu_custom_call.1} parent=47 // pred_check
          %p449 = pneg %p93
        $region54: #{tpu_custom_call.1} parent=47 // pred_check_branch
          %451 = sbr.rel (%p449) target = $region56
        $region55: #{tpu_custom_call.1} parent=47 // pred_region
          %s452 = sand.u32 %s33, 1
          %s453 = scalar_lea.sflag [#allocation8], %s452
          %s454 = sand.u32 %s83, 1
          %s455 = smul.addr %s454, 8
          %s456 = scalar_lea.vmem [#allocation7], %s455
          %s458 = ssub.s32 128, 128
          %459 = vsyncadd %s453, %s458
          %s460 = smul.addr %s40, 128
          %s461 = scalar_lea.hbm %s1, %s460
          %s463 = sshll.u32 %s456, 4
          %s464 = int_to_ptr.vmem [resolvable:$true] %s463
          %466 = dma.hbm_to_vmem [thread:$0]  %s461, 128, %s464, %s453
        $region56: #{tpu_custom_call.1} parent=47 // pred_fallthru
          _
        // Predicated region
        $region57: #{tpu_custom_call.1} parent=47 // pred_check
          %p467 = pneg %p119
        $region58: #{tpu_custom_call.1} parent=47 // pred_check_branch
          %469 = sbr.rel (%p467) target = $region60
        $region59: #{tpu_custom_call.1} parent=47 // pred_region
          %s470 = sand.u32 %s33, 1
          %s471 = scalar_lea.sflag [#allocation8], %s470
          %s472 = sand.u32 %s109, 1
          %s473 = smul.addr %s472, 8
          %s474 = scalar_lea.vmem [#allocation9], %s473
          %s476 = ssub.s32 128, 128
          %477 = vsyncadd %s471, %s476
          %s478 = smul.addr %s40, 128
          %s479 = scalar_lea.hbm %s2, %s478
          %s481 = sshll.u32 %s474, 4
          %s482 = int_to_ptr.vmem [resolvable:$true] %s481
          %484 = dma.hbm_to_vmem [thread:$0]  %s479, 128, %s482, %s471
        $region60: #{tpu_custom_call.1} parent=47 // pred_fallthru
          _
      $region48: #{tpu_custom_call.1} parent=5 // pred_fallthru
        _
      %p485 = scmp.le.s32.totalorder 1, %s33
      %p486 = scmp.lt.s32.totalorder %s33, 3
      %p487 = pnand %p485, %p486
      %p488 = pneg %p487
      // Predicated region
      $region61: #{tpu_custom_call.1} parent=5 // pred_check
        _
      $region62: #{tpu_custom_call.1} parent=5 // pred_check_branch
        %490 = sbr.rel (%p487) target = $region64
      $region63: #{tpu_custom_call.1} parent=5 // pred_region
        %s491 = ssub.s32 %s33, 1
        %s492 = sand.u32 %s60, 1
        %s493 = scalar_lea.sflag [#allocation5], %s492
        %s494 = sand.u32 %s60, 1
        %s495 = smul.addr %s494, 8
        %s496 = scalar_lea.vmem [#allocation4], %s495
        // Predicated region
        $region65: #{tpu_custom_call.1} parent=63 // pred_check
          %p497 = pneg %p73
        $region66: #{tpu_custom_call.1} parent=63 // pred_check_branch
          %499 = sbr.rel (%p497) target = $region68
        $region67: #{tpu_custom_call.1} parent=63 // pred_region
          %500 = dma.done %s493, 128
        $region68: #{tpu_custom_call.1} parent=63 // pred_fallthru
          _
        %s501 = sand.u32 %s38, 1
        %s502 = scalar_lea.sflag [#allocation8], %s501
        %s503 = sand.u32 %s86, 1
        %s504 = smul.addr %s503, 8
        %s505 = scalar_lea.vmem [#allocation7], %s504
        // Predicated region
        $region69: #{tpu_custom_call.1} parent=63 // pred_check
          %p506 = pneg %p99
        $region70: #{tpu_custom_call.1} parent=63 // pred_check_branch
          %508 = sbr.rel (%p506) target = $region72
        $region71: #{tpu_custom_call.1} parent=63 // pred_region
          %509 = dma.done %s502, 128
        $region72: #{tpu_custom_call.1} parent=63 // pred_fallthru
          _
        %s510 = sand.u32 %s38, 1
        %s511 = scalar_lea.sflag [#allocation8], %s510
        %s512 = sand.u32 %s112, 1
        %s513 = smul.addr %s512, 8
        %s514 = scalar_lea.vmem [#allocation9], %s513
        // Predicated region
        $region73: #{tpu_custom_call.1} parent=63 // pred_check
          %p515 = pneg %p125
        $region74: #{tpu_custom_call.1} parent=63 // pred_check_branch
          %517 = sbr.rel (%p515) target = $region76
        $region75: #{tpu_custom_call.1} parent=63 // pred_region
          %518 = dma.done %s511, 128
        $region76: #{tpu_custom_call.1} parent=63 // pred_fallthru
          _
        // Predicated region
        $region77: #{tpu_custom_call.1} parent=63 // pred_check
          %p519 = pneg %p146
        $region78: #{tpu_custom_call.1} parent=63 // pred_check_branch
          %521 = sbr.rel (%p519) target = $region80
        $region79: #{tpu_custom_call.1} parent=63 // pred_region
          %522 = dma.done [#allocation11], 512
        $region80: #{tpu_custom_call.1} parent=63 // pred_fallthru
          _
        // Predicated region
        $region81: #{tpu_custom_call.1} parent=63 // pred_check
          %p523 = pneg %p188
        $region82: #{tpu_custom_call.1} parent=63 // pred_check_branch
          %525 = sbr.rel (%p523) target = $region84
        $region83: #{tpu_custom_call.1} parent=63 // pred_region
          %526 = dma.done [#allocation11], 512
        $region84: #{tpu_custom_call.1} parent=63 // pred_fallthru
          _
        // Predicated region
        $region85: #{tpu_custom_call.1} parent=63 // pred_check
          %p527 = pneg %p230
        $region86: #{tpu_custom_call.1} parent=63 // pred_check_branch
          %529 = sbr.rel (%p527) target = $region88
        $region87: #{tpu_custom_call.1} parent=63 // pred_region
          %530 = dma.done [#allocation14], 512
        $region88: #{tpu_custom_call.1} parent=63 // pred_fallthru
          _
        // Predicated region
        $region89: #{tpu_custom_call.1} parent=63 // pred_check
          %p531 = pneg %p251
        $region90: #{tpu_custom_call.1} parent=63 // pred_check_branch
          %533 = sbr.rel (%p531) target = $region92
        $region91: #{tpu_custom_call.1} parent=63 // pred_region
          %534 = dma.done [#allocation14], 16
        $region92: #{tpu_custom_call.1} parent=63 // pred_fallthru
          _
        %s535 = sand.u32 %s60, 1
        %s536 = scalar_lea.sflag [#allocation5], %s535
        %s537 = sand.u32 %s60, 1
        %s538 = smul.addr %s537, 8
        %s539 = scalar_lea.vmem [#allocation4], %s538
        %p540 = pneg %p73
        %p541 = pneg %p70
        %s542 = sand.u32 %s38, 1
        %s543 = scalar_lea.sflag [#allocation8], %s542
        %s544 = sand.u32 %s86, 1
        %s545 = smul.addr %s544, 8
        %s546 = scalar_lea.vmem [#allocation7], %s545
        %p547 = pneg %p99
        %p548 = pneg %p96
        %s549 = sand.u32 %s38, 1
        %s550 = scalar_lea.sflag [#allocation8], %s549
        %s551 = sand.u32 %s112, 1
        %s552 = smul.addr %s551, 8
        %s553 = scalar_lea.vmem [#allocation9], %s552
        %p554 = pneg %p125
        %p555 = pneg %p122
        %p556 = pneg %p146
        %p557 = pneg %p143
        %p558 = pneg %p167
        %p559 = pneg %p164
        %p560 = pneg %p188
        %p561 = pneg %p185
        %p562 = pneg %p209
        %p563 = pneg %p206
        %p564 = pneg %p230
        %p565 = pneg %p227
        %p566 = pneg %p251
        %p567 = pneg %p248
        %p568 = pneg %p272
        %p569 = pneg %p269
        %p570 = pneg %p293
        %p571 = pneg %p290
        %p572 = pneg %p321
        %p573 = pneg %p318
        %s574 = sand.u32 %s308, 1
        %s575 = scalar_lea.sflag [#allocation6], %s574
        %s576 = sand.u32 %s308, 1
        %s577 = smul.addr %s576, 8
        %s578 = scalar_lea.vmem [#allocation16], %s577
        %p579 = pneg %p349
        %p580 = pneg %p346
        %s581 = sand.u32 %s336, 1
        %s582 = scalar_lea.sflag [#allocation18], %s581
        %s583 = sand.u32 %s336, 1
        %s584 = smul.addr %s583, 32
        %s585 = scalar_lea.vmem [#allocation17], %s584
        %p586 = scmp.eq.s32.totalorder %s43, 0
        // Predicated region
        $region93: #{tpu_custom_call.1} parent=63 // pred_check
          %p587 = pneg %p586
        $region94: #{tpu_custom_call.1} parent=63 // pred_check_branch
          %589 = sbr.rel (%p587) target = $region96
        $region95: #{tpu_custom_call.1} parent=63 // pred_region
          %v590 = vld [vmem:[%s505] sm:$0xff]
          %v591 = vld [vmem:[%s514] sm:$0xff]
          %v592 = vld [vmem:[#allocation12] sm:$0xff]
          %v593 = vld [vmem:[#allocation12 + $0x8] sm:$0xff]
          %v594 = vld [vmem:[#allocation12 + $0x10] sm:$0xff]
          %v595 = vld [vmem:[#allocation12 + $0x18] sm:$0xff]
          %v596 = vld [vmem:[%s6] sm:$0x1]
          %v598 = vlaneseq
          %v599 = vshrl.u32 %v598, 7
          %v600 = vsub.s32 0, %v599
          %v601 = vrot.slane %v596, %v600
          %vm603 = vcmask 261120
          %v605 = vsel %vm603, %v590, 0
          %607 = vmatprep.subr.mxu0 0.0
          %608 = vmatpush1.msra.mxu0 %v592
          %609 = vmatprep.subr.mxu0 0.0
          %610 = vmatpush1.msra.mxu0 %v593
          %611 = vmatprep.subr.mxu0 0.0
          %612 = vmatpush1.msra.mxu0 %v594
          %613 = vmatprep.subr.mxu0 0.0
          %614 = vmatpush1.msra.mxu0 %v595
          %615 = vmatprep.subr.mxu0 0.0
          %616 = vmatpush1.msra.mxu0 0.0
          %617 = vmatprep.subr.mxu0 0.0
          %618 = vmatpush1.msra.mxu0 0.0
          %619 = vmatprep.subr.mxu0 0.0
          %620 = vmatpush1.msra.mxu0 0.0
          %621 = vmatprep.subr.mxu0 0.0
          %622 = vmatpush1.msra.mxu0 0.0
          %623 = vmatprep.subr.mxu0 0.0
          %624 = vmatpush1.msra.mxu0 0.0
          %625 = vmatprep.subr.mxu0 0.0
          %626 = vmatpush1.msra.mxu0 0.0
          %627 = vmatprep.subr.mxu0 0.0
          %628 = vmatpush1.msra.mxu0 0.0
          %629 = vmatprep.subr.mxu0 0.0
          %630 = vmatpush1.msra.mxu0 0.0
          %631 = vmatprep.subr.mxu0 0.0
          %632 = vmatpush1.msra.mxu0 0.0
          %633 = vmatprep.subr.mxu0 0.0
          %634 = vmatpush1.msra.mxu0 0.0
          %635 = vmatprep.subr.mxu0 0.0
          %636 = vmatpush1.msra.mxu0 0.0
          %637 = vmatprep.subr.mxu0 0.0
          %638 = vmatpush1.msra.mxu0 0.0
          %639 = vmatprep.subr.mxu0 0.0
          %640 = vmatpush1.msra.mxu0 0.0
          %641 = vmatprep.subr.mxu0 0.0
          %642 = vmatpush1.msra.mxu0 0.0
          %643 = vmatprep.subr.mxu0 0.0
          %644 = vmatpush1.msra.mxu0 0.0
          %645 = vmatprep.subr.mxu0 0.0
          %646 = vmatpush1.msra.mxu0 0.0
          %647 = vmatprep.subr.mxu0 0.0
          %648 = vmatpush1.msra.mxu0 0.0
          %649 = vmatprep.subr.mxu0 0.0
          %650 = vmatpush1.msra.mxu0 0.0
          %651 = vmatprep.subr.mxu0 0.0
          %652 = vmatpush1.msra.mxu0 0.0
          %653 = vmatprep.subr.mxu0 0.0
          %654 = vmatpush1.msra.mxu0 0.0
          %655 = vmatprep.subr.mxu0 0.0
          %656 = vmatpush1.msra.mxu0 0.0
          %657 = vmatprep.subr.mxu0 0.0
          %658 = vmatpush1.msra.mxu0 0.0
          %659 = vmatprep.subr.mxu0 0.0
          %660 = vmatpush1.msra.mxu0 0.0
          %661 = vmatprep.subr.mxu0 0.0
          %662 = vmatpush1.msra.mxu0 0.0
          %663 = vmatprep.subr.mxu0 0.0
          %664 = vmatpush1.msra.mxu0 0.0
          %665 = vmatprep.subr.mxu0 0.0
          %666 = vmatpush1.msra.mxu0 0.0
          %667 = vmatprep.subr.mxu0 0.0
          %668 = vmatpush1.msra.mxu0 0.0
          %669 = vmatprep.subr.mxu0 0.0
          %670 = vmatpush1.msra.mxu0 0.0
          %671 = vmatprep.mubr.f32.mxu0 0.0
          %672 = vmatmul.mubr.f32.gmra.mrb[0].mxu0 %v605
          %v673 = vpop.f32.mrb[0].mxu0
          %v674 = vadd.f32 %v601, %v673
          %v675 = vpop.f32.mrb[0].mxu0
          %676 = vdwg.mxu0
          %677 = vst.msk [vmem:[#allocation2] sm:$0xff] %vm603, %v674
          %v678 = vld [vmem:[#allocation13] sm:$0xff]
          %v679 = vld [vmem:[#allocation13 + $0x8] sm:$0xff]
          %v680 = vld [vmem:[#allocation13 + $0x10] sm:$0xff]
          %v681 = vld [vmem:[#allocation13 + $0x18] sm:$0xff]
          %v682 = vld [vmem:[#allocation15] sm:$0x1]
          %v684 = vlaneseq
          %v685 = vshrl.u32 %v684, 7
          %v686 = vsub.s32 0, %v685
          %v687 = vrot.slane %v682, %v686
          %v690 = vsel %vm603, %v591, 0
          %692 = vmatprep.subr.mxu0 0.0
          %693 = vmatpush1.msra.mxu0 %v678
          %694 = vmatprep.subr.mxu0 0.0
          %695 = vmatpush1.msra.mxu0 %v679
          %696 = vmatprep.subr.mxu0 0.0
          %697 = vmatpush1.msra.mxu0 %v680
          %698 = vmatprep.subr.mxu0 0.0
          %699 = vmatpush1.msra.mxu0 %v681
          %700 = vmatprep.subr.mxu0 0.0
          %701 = vmatpush1.msra.mxu0 0.0
          %702 = vmatprep.subr.mxu0 0.0
          %703 = vmatpush1.msra.mxu0 0.0
          %704 = vmatprep.subr.mxu0 0.0
          %705 = vmatpush1.msra.mxu0 0.0
          %706 = vmatprep.subr.mxu0 0.0
          %707 = vmatpush1.msra.mxu0 0.0
          %708 = vmatprep.subr.mxu0 0.0
          %709 = vmatpush1.msra.mxu0 0.0
          %710 = vmatprep.subr.mxu0 0.0
          %711 = vmatpush1.msra.mxu0 0.0
          %712 = vmatprep.subr.mxu0 0.0
          %713 = vmatpush1.msra.mxu0 0.0
          %714 = vmatprep.subr.mxu0 0.0
          %715 = vmatpush1.msra.mxu0 0.0
          %716 = vmatprep.subr.mxu0 0.0
          %717 = vmatpush1.msra.mxu0 0.0
          %718 = vmatprep.subr.mxu0 0.0
          %719 = vmatpush1.msra.mxu0 0.0
          %720 = vmatprep.subr.mxu0 0.0
          %721 = vmatpush1.msra.mxu0 0.0
          %722 = vmatprep.subr.mxu0 0.0
          %723 = vmatpush1.msra.mxu0 0.0
          %724 = vmatprep.subr.mxu0 0.0
          %725 = vmatpush1.msra.mxu0 0.0
          %726 = vmatprep.subr.mxu0 0.0
          %727 = vmatpush1.msra.mxu0 0.0
          %728 = vmatprep.subr.mxu0 0.0
          %729 = vmatpush1.msra.mxu0 0.0
          %730 = vmatprep.subr.mxu0 0.0
          %731 = vmatpush1.msra.mxu0 0.0
          %732 = vmatprep.subr.mxu0 0.0
          %733 = vmatpush1.msra.mxu0 0.0
          %734 = vmatprep.subr.mxu0 0.0
          %735 = vmatpush1.msra.mxu0 0.0
          %736 = vmatprep.subr.mxu0 0.0
          %737 = vmatpush1.msra.mxu0 0.0
          %738 = vmatprep.subr.mxu0 0.0
          %739 = vmatpush1.msra.mxu0 0.0
          %740 = vmatprep.subr.mxu0 0.0
          %741 = vmatpush1.msra.mxu0 0.0
          %742 = vmatprep.subr.mxu0 0.0
          %743 = vmatpush1.msra.mxu0 0.0
          %744 = vmatprep.subr.mxu0 0.0
          %745 = vmatpush1.msra.mxu0 0.0
          %746 = vmatprep.subr.mxu0 0.0
          %747 = vmatpush1.msra.mxu0 0.0
          %748 = vmatprep.subr.mxu0 0.0
          %749 = vmatpush1.msra.mxu0 0.0
          %750 = vmatprep.subr.mxu0 0.0
          %751 = vmatpush1.msra.mxu0 0.0
          %752 = vmatprep.subr.mxu0 0.0
          %753 = vmatpush1.msra.mxu0 0.0
          %754 = vmatprep.subr.mxu0 0.0
          %755 = vmatpush1.msra.mxu0 0.0
          %756 = vmatprep.mubr.f32.mxu0 0.0
          %757 = vmatmul.mubr.f32.gmra.mrb[0].mxu0 %v690
          %v758 = vpop.f32.mrb[0].mxu0
          %v759 = vadd.f32 %v687, %v758
          %v760 = vpop.f32.mrb[0].mxu0
          %761 = vdwg.mxu0
          %762 = vst.msk [vmem:[#allocation3] sm:$0xff] %vm603, %v759
        $region96: #{tpu_custom_call.1} parent=63 // pred_fallthru
          _
        %v763 = vld [vmem:[%s496] sm:$0xff]
        %v764 = vld [vmem:[#allocation10] sm:$0xff]
        %v765 = vld [vmem:[#allocation10 + $0x8] sm:$0xff]
        %v766 = vld [vmem:[#allocation10 + $0x10] sm:$0xff]
        %v767 = vld [vmem:[#allocation10 + $0x18] sm:$0xff]
        %v768 = vld [vmem:[%s4] sm:$0x1]
        %v770 = vlaneseq
        %v771 = vshrl.u32 %v770, 7
        %v772 = vsub.s32 0, %v771
        %v773 = vrot.slane %v768, %v772
        %vm775 = vcmask 261120
        %v777 = vsel %vm775, %v763, 0
        %779 = vmatprep.subr.mxu0 0.0
        %780 = vmatpush1.msra.mxu0 %v764
        %781 = vmatprep.subr.mxu0 0.0
        %782 = vmatpush1.msra.mxu0 %v765
        %783 = vmatprep.subr.mxu0 0.0
        %784 = vmatpush1.msra.mxu0 %v766
        %785 = vmatprep.subr.mxu0 0.0
        %786 = vmatpush1.msra.mxu0 %v767
        %787 = vmatprep.subr.mxu0 0.0
        %788 = vmatpush1.msra.mxu0 0.0
        %789 = vmatprep.subr.mxu0 0.0
        %790 = vmatpush1.msra.mxu0 0.0
        %791 = vmatprep.subr.mxu0 0.0
        %792 = vmatpush1.msra.mxu0 0.0
        %793 = vmatprep.subr.mxu0 0.0
        %794 = vmatpush1.msra.mxu0 0.0
        %795 = vmatprep.subr.mxu0 0.0
        %796 = vmatpush1.msra.mxu0 0.0
        %797 = vmatprep.subr.mxu0 0.0
        %798 = vmatpush1.msra.mxu0 0.0
        %799 = vmatprep.subr.mxu0 0.0
        %800 = vmatpush1.msra.mxu0 0.0
        %801 = vmatprep.subr.mxu0 0.0
        %802 = vmatpush1.msra.mxu0 0.0
        %803 = vmatprep.subr.mxu0 0.0
        %804 = vmatpush1.msra.mxu0 0.0
        %805 = vmatprep.subr.mxu0 0.0
        %806 = vmatpush1.msra.mxu0 0.0
        %807 = vmatprep.subr.mxu0 0.0
        %808 = vmatpush1.msra.mxu0 0.0
        %809 = vmatprep.subr.mxu0 0.0
        %810 = vmatpush1.msra.mxu0 0.0
        %811 = vmatprep.subr.mxu0 0.0
        %812 = vmatpush1.msra.mxu0 0.0
        %813 = vmatprep.subr.mxu0 0.0
        %814 = vmatpush1.msra.mxu0 0.0
        %815 = vmatprep.subr.mxu0 0.0
        %816 = vmatpush1.msra.mxu0 0.0
        %817 = vmatprep.subr.mxu0 0.0
        %818 = vmatpush1.msra.mxu0 0.0
        %819 = vmatprep.subr.mxu0 0.0
        %820 = vmatpush1.msra.mxu0 0.0
        %821 = vmatprep.subr.mxu0 0.0
        %822 = vmatpush1.msra.mxu0 0.0
        %823 = vmatprep.subr.mxu0 0.0
        %824 = vmatpush1.msra.mxu0 0.0
        %825 = vmatprep.subr.mxu0 0.0
        %826 = vmatpush1.msra.mxu0 0.0
        %827 = vmatprep.subr.mxu0 0.0
        %828 = vmatpush1.msra.mxu0 0.0
        %829 = vmatprep.subr.mxu0 0.0
        %830 = vmatpush1.msra.mxu0 0.0
        %831 = vmatprep.subr.mxu0 0.0
        %832 = vmatpush1.msra.mxu0 0.0
        %833 = vmatprep.subr.mxu0 0.0
        %834 = vmatpush1.msra.mxu0 0.0
        %835 = vmatprep.subr.mxu0 0.0
        %836 = vmatpush1.msra.mxu0 0.0
        %837 = vmatprep.subr.mxu0 0.0
        %838 = vmatpush1.msra.mxu0 0.0
        %839 = vmatprep.subr.mxu0 0.0
        %840 = vmatpush1.msra.mxu0 0.0
        %841 = vmatprep.subr.mxu0 0.0
        %842 = vmatpush1.msra.mxu0 0.0
        %843 = vmatprep.mubr.f32.mxu0 0.0
        %844 = vmatmul.mubr.f32.gmra.mrb[0].mxu0 %v777
        %v845 = vpop.f32.mrb[0].mxu0
        %v846 = vadd.f32 %v773, %v845
        %v847 = vpop.f32.mrb[0].mxu0
        %848 = vdwg.mxu0
        %v849 = vmul.f32 %v846, 0.35355338
        %851 = vrot.lane.b32.xlu0 %v849, 120
        %v852 = vpop.permute.xlu0 %851
        %854 = vrot.lane.b32.xlu0 %v849, 112
        %v855 = vpop.permute.xlu0 %854
        %857 = vrot.lane.b32.xlu0 %v849, 104
        %v858 = vpop.permute.xlu0 %857
        %v860 = vcombine.low %v849, %v855
        %v861 = vcombine.high %v849, %v855
        %v863 = vunpack.c.l.s4 1983009808
        %v864 = vunpack.c.0.s8 %v863
        %v865 = vlaneseq
        %v866 = vshrl.u32 %v865, 7
        %v867 = vsub.s32 %v864, %v866
        %v868 = vrot.slane %v860, %v867
        %v870 = vunpack.c.l.s4 1983009808
        %v871 = vunpack.c.0.s8 %v870
        %v872 = vlaneseq
        %v873 = vshrl.u32 %v872, 7
        %v874 = vsub.s32 %v871, %v873
        %v875 = vrot.slane %v861, %v874
        %v876 = vcombine.low %v852, %v858
        %v877 = vcombine.high %v852, %v858
        %v879 = vunpack.c.l.s4 1983009808
        %v880 = vunpack.c.0.s8 %v879
        %v881 = vlaneseq
        %v882 = vshrl.u32 %v881, 7
        %v883 = vsub.s32 %v880, %v882
        %v884 = vrot.slane %v876, %v883
        %v886 = vunpack.c.l.s4 1983009808
        %v887 = vunpack.c.0.s8 %v886
        %v888 = vlaneseq
        %v889 = vshrl.u32 %v888, 7
        %v890 = vsub.s32 %v887, %v889
        %v891 = vrot.slane %v877, %v890
        %v892 = vcombine.low %v868, %v884
        %v893 = vcombine.high %v868, %v884
        %v895 = vunpack.c.l.s4 1934713408
        %v896 = vunpack.c.0.s8 %v895
        %v897 = vlaneseq
        %v898 = vshrl.u32 %v897, 7
        %v899 = vsub.s32 %v896, %v898
        %v900 = vrot.slane %v892, %v899
        %v902 = vunpack.c.l.s4 1934713408
        %v903 = vunpack.c.0.s8 %v902
        %v904 = vlaneseq
        %v905 = vshrl.u32 %v904, 7
        %v906 = vsub.s32 %v903, %v905
        %v907 = vrot.slane %v893, %v906
        %v908 = vcombine.low %v875, %v891
        %v909 = vcombine.high %v875, %v891
        %v911 = vunpack.c.l.s4 1934713408
        %v912 = vunpack.c.0.s8 %v911
        %v913 = vlaneseq
        %v914 = vshrl.u32 %v913, 7
        %v915 = vsub.s32 %v912, %v914
        %v916 = vrot.slane %v908, %v915
        %v918 = vunpack.c.l.s4 1934713408
        %v919 = vunpack.c.0.s8 %v918
        %v920 = vlaneseq
        %v921 = vshrl.u32 %v920, 7
        %v922 = vsub.s32 %v919, %v921
        %v923 = vrot.slane %v909, %v922
        %v924 = vcombine.high %v900, 0.0
        %v925 = vcombine.high %v907, 0.0
        %v926 = vcombine.high %v916, 0.0
        %v927 = vcombine.high %v923, 0.0
        %v928 = vcombine.low %v900, %v907
        %v930 = vunpack.c.l.s4 1983009808
        %v931 = vunpack.c.0.s8 %v930
        %v932 = vlaneseq
        %v933 = vshrl.u32 %v932, 7
        %v934 = vsub.s32 %v931, %v933
        %v935 = vrot.slane %v928, %v934
        %v936 = vcombine.low %v924, %v925
        %v938 = vunpack.c.l.s4 1983009808
        %v939 = vunpack.c.0.s8 %v938
        %v940 = vlaneseq
        %v941 = vshrl.u32 %v940, 7
        %v942 = vsub.s32 %v939, %v941
        %v943 = vrot.slane %v936, %v942
        %v944 = vcombine.low %v916, %v923
        %v946 = vunpack.c.l.s4 1983009808
        %v947 = vunpack.c.0.s8 %v946
        %v948 = vlaneseq
        %v949 = vshrl.u32 %v948, 7
        %v950 = vsub.s32 %v947, %v949
        %v951 = vrot.slane %v944, %v950
        %v952 = vcombine.low %v926, %v927
        %v954 = vunpack.c.l.s4 1983009808
        %v955 = vunpack.c.0.s8 %v954
        %v956 = vlaneseq
        %v957 = vshrl.u32 %v956, 7
        %v958 = vsub.s32 %v955, %v957
        %v959 = vrot.slane %v952, %v958
        %v960 = vcombine.low %v935, %v943
        %v961 = vcombine.high %v935, %v943
        %v963 = vunpack.c.l.s4 1934713408
        %v964 = vunpack.c.0.s8 %v963
        %v965 = vlaneseq
        %v966 = vshrl.u32 %v965, 7
        %v967 = vsub.s32 %v964, %v966
        %v968 = vrot.slane %v960, %v967
        %v970 = vunpack.c.l.s4 1934713408
        %v971 = vunpack.c.0.s8 %v970
        %v972 = vlaneseq
        %v973 = vshrl.u32 %v972, 7
        %v974 = vsub.s32 %v971, %v973
        %v975 = vrot.slane %v961, %v974
        %v976 = vcombine.low %v951, %v959
        %v977 = vcombine.high %v951, %v959
        %v979 = vunpack.c.l.s4 1934713408
        %v980 = vunpack.c.0.s8 %v979
        %v981 = vlaneseq
        %v982 = vshrl.u32 %v981, 7
        %v983 = vsub.s32 %v980, %v982
        %v984 = vrot.slane %v976, %v983
        %v986 = vunpack.c.l.s4 1934713408
        %v987 = vunpack.c.0.s8 %v986
        %v988 = vlaneseq
        %v989 = vshrl.u32 %v988, 7
        %v990 = vsub.s32 %v987, %v989
        %v991 = vrot.slane %v977, %v990
        %v992 = vcombine.low %v968, %v984
        %v993 = vcombine.high %v968, %v984
        %v994 = vcombine.low %v975, %v991
        %v995 = vcombine.high %v975, %v991
        %v996 = vld [vmem:[#allocation2] sm:$0xff]
        %998 = vrot.lane.b32.xlu0 %v996, 120
        %v999 = vpop.permute.xlu0 %998
        %1001 = vrot.lane.b32.xlu0 %v996, 112
        %v1002 = vpop.permute.xlu0 %1001
        %1004 = vrot.lane.b32.xlu0 %v996, 104
        %v1005 = vpop.permute.xlu0 %1004
        %v1007 = vcombine.low %v996, %v1002
        %v1008 = vcombine.high %v996, %v1002
        %v1010 = vunpack.c.l.s4 1983009808
        %v1011 = vunpack.c.0.s8 %v1010
        %v1012 = vlaneseq
        %v1013 = vshrl.u32 %v1012, 7
        %v1014 = vsub.s32 %v1011, %v1013
        %v1015 = vrot.slane %v1007, %v1014
        %v1017 = vunpack.c.l.s4 1983009808
        %v1018 = vunpack.c.0.s8 %v1017
        %v1019 = vlaneseq
        %v1020 = vshrl.u32 %v1019, 7
        %v1021 = vsub.s32 %v1018, %v1020
        %v1022 = vrot.slane %v1008, %v1021
        %v1023 = vcombine.low %v999, %v1005
        %v1024 = vcombine.high %v999, %v1005
        %v1026 = vunpack.c.l.s4 1983009808
        %v1027 = vunpack.c.0.s8 %v1026
        %v1028 = vlaneseq
        %v1029 = vshrl.u32 %v1028, 7
        %v1030 = vsub.s32 %v1027, %v1029
        %v1031 = vrot.slane %v1023, %v1030
        %v1033 = vunpack.c.l.s4 1983009808
        %v1034 = vunpack.c.0.s8 %v1033
        %v1035 = vlaneseq
        %v1036 = vshrl.u32 %v1035, 7
        %v1037 = vsub.s32 %v1034, %v1036
        %v1038 = vrot.slane %v1024, %v1037
        %v1039 = vcombine.low %v1015, %v1031
        %v1040 = vcombine.high %v1015, %v1031
        %v1042 = vunpack.c.l.s4 1934713408
        %v1043 = vunpack.c.0.s8 %v1042
        %v1044 = vlaneseq
        %v1045 = vshrl.u32 %v1044, 7
        %v1046 = vsub.s32 %v1043, %v1045
        %v1047 = vrot.slane %v1039, %v1046
        %v1049 = vunpack.c.l.s4 1934713408
        %v1050 = vunpack.c.0.s8 %v1049
        %v1051 = vlaneseq
        %v1052 = vshrl.u32 %v1051, 7
        %v1053 = vsub.s32 %v1050, %v1052
        %v1054 = vrot.slane %v1040, %v1053
        %v1055 = vcombine.low %v1022, %v1038
        %v1056 = vcombine.high %v1022, %v1038
        %v1058 = vunpack.c.l.s4 1934713408
        %v1059 = vunpack.c.0.s8 %v1058
        %v1060 = vlaneseq
        %v1061 = vshrl.u32 %v1060, 7
        %v1062 = vsub.s32 %v1059, %v1061
        %v1063 = vrot.slane %v1055, %v1062
        %v1065 = vunpack.c.l.s4 1934713408
        %v1066 = vunpack.c.0.s8 %v1065
        %v1067 = vlaneseq
        %v1068 = vshrl.u32 %v1067, 7
        %v1069 = vsub.s32 %v1066, %v1068
        %v1070 = vrot.slane %v1056, %v1069
        %v1071 = vcombine.high %v1047, 0.0
        %v1072 = vcombine.high %v1054, 0.0
        %v1073 = vcombine.high %v1063, 0.0
        %v1074 = vcombine.high %v1070, 0.0
        %v1075 = vcombine.low %v1047, %v1054
        %v1077 = vunpack.c.l.s4 1983009808
        %v1078 = vunpack.c.0.s8 %v1077
        %v1079 = vlaneseq
        %v1080 = vshrl.u32 %v1079, 7
        %v1081 = vsub.s32 %v1078, %v1080
        %v1082 = vrot.slane %v1075, %v1081
        %v1083 = vcombine.low %v1071, %v1072
        %v1085 = vunpack.c.l.s4 1983009808
        %v1086 = vunpack.c.0.s8 %v1085
        %v1087 = vlaneseq
        %v1088 = vshrl.u32 %v1087, 7
        %v1089 = vsub.s32 %v1086, %v1088
        %v1090 = vrot.slane %v1083, %v1089
        %v1091 = vcombine.low %v1063, %v1070
        %v1093 = vunpack.c.l.s4 1983009808
        %v1094 = vunpack.c.0.s8 %v1093
        %v1095 = vlaneseq
        %v1096 = vshrl.u32 %v1095, 7
        %v1097 = vsub.s32 %v1094, %v1096
        %v1098 = vrot.slane %v1091, %v1097
        %v1099 = vcombine.low %v1073, %v1074
        %v1101 = vunpack.c.l.s4 1983009808
        %v1102 = vunpack.c.0.s8 %v1101
        %v1103 = vlaneseq
        %v1104 = vshrl.u32 %v1103, 7
        %v1105 = vsub.s32 %v1102, %v1104
        %v1106 = vrot.slane %v1099, %v1105
        %v1107 = vcombine.low %v1082, %v1090
        %v1108 = vcombine.high %v1082, %v1090
        %v1110 = vunpack.c.l.s4 1934713408
        %v1111 = vunpack.c.0.s8 %v1110
        %v1112 = vlaneseq
        %v1113 = vshrl.u32 %v1112, 7
        %v1114 = vsub.s32 %v1111, %v1113
        %v1115 = vrot.slane %v1107, %v1114
        %v1117 = vunpack.c.l.s4 1934713408
        %v1118 = vunpack.c.0.s8 %v1117
        %v1119 = vlaneseq
        %v1120 = vshrl.u32 %v1119, 7
        %v1121 = vsub.s32 %v1118, %v1120
        %v1122 = vrot.slane %v1108, %v1121
        %v1123 = vcombine.low %v1098, %v1106
        %v1124 = vcombine.high %v1098, %v1106
        %v1126 = vunpack.c.l.s4 1934713408
        %v1127 = vunpack.c.0.s8 %v1126
        %v1128 = vlaneseq
        %v1129 = vshrl.u32 %v1128, 7
        %v1130 = vsub.s32 %v1127, %v1129
        %v1131 = vrot.slane %v1123, %v1130
        %v1133 = vunpack.c.l.s4 1934713408
        %v1134 = vunpack.c.0.s8 %v1133
        %v1135 = vlaneseq
        %v1136 = vshrl.u32 %v1135, 7
        %v1137 = vsub.s32 %v1134, %v1136
        %v1138 = vrot.slane %v1124, %v1137
        %v1139 = vcombine.low %v1115, %v1131
        %v1140 = vcombine.high %v1115, %v1131
        %v1141 = vcombine.low %v1122, %v1138
        %v1142 = vcombine.high %v1122, %v1138
        %v1143 = vld [vmem:[#allocation3] sm:$0xff]
        %1145 = vrot.lane.b32.xlu0 %v1143, 120
        %v1146 = vpop.permute.xlu0 %1145
        %1148 = vrot.lane.b32.xlu0 %v1143, 112
        %v1149 = vpop.permute.xlu0 %1148
        %1151 = vrot.lane.b32.xlu0 %v1143, 104
        %v1152 = vpop.permute.xlu0 %1151
        %v1154 = vcombine.low %v1143, %v1149
        %v1155 = vcombine.high %v1143, %v1149
        %v1157 = vunpack.c.l.s4 1983009808
        %v1158 = vunpack.c.0.s8 %v1157
        %v1159 = vlaneseq
        %v1160 = vshrl.u32 %v1159, 7
        %v1161 = vsub.s32 %v1158, %v1160
        %v1162 = vrot.slane %v1154, %v1161
        %v1164 = vunpack.c.l.s4 1983009808
        %v1165 = vunpack.c.0.s8 %v1164
        %v1166 = vlaneseq
        %v1167 = vshrl.u32 %v1166, 7
        %v1168 = vsub.s32 %v1165, %v1167
        %v1169 = vrot.slane %v1155, %v1168
        %v1170 = vcombine.low %v1146, %v1152
        %v1171 = vcombine.high %v1146, %v1152
        %v1173 = vunpack.c.l.s4 1983009808
        %v1174 = vunpack.c.0.s8 %v1173
        %v1175 = vlaneseq
        %v1176 = vshrl.u32 %v1175, 7
        %v1177 = vsub.s32 %v1174, %v1176
        %v1178 = vrot.slane %v1170, %v1177
        %v1180 = vunpack.c.l.s4 1983009808
        %v1181 = vunpack.c.0.s8 %v1180
        %v1182 = vlaneseq
        %v1183 = vshrl.u32 %v1182, 7
        %v1184 = vsub.s32 %v1181, %v1183
        %v1185 = vrot.slane %v1171, %v1184
        %v1186 = vcombine.low %v1162, %v1178
        %v1187 = vcombine.high %v1162, %v1178
        %v1189 = vunpack.c.l.s4 1934713408
        %v1190 = vunpack.c.0.s8 %v1189
        %v1191 = vlaneseq
        %v1192 = vshrl.u32 %v1191, 7
        %v1193 = vsub.s32 %v1190, %v1192
        %v1194 = vrot.slane %v1186, %v1193
        %v1196 = vunpack.c.l.s4 1934713408
        %v1197 = vunpack.c.0.s8 %v1196
        %v1198 = vlaneseq
        %v1199 = vshrl.u32 %v1198, 7
        %v1200 = vsub.s32 %v1197, %v1199
        %v1201 = vrot.slane %v1187, %v1200
        %v1202 = vcombine.low %v1169, %v1185
        %v1203 = vcombine.high %v1169, %v1185
        %v1205 = vunpack.c.l.s4 1934713408
        %v1206 = vunpack.c.0.s8 %v1205
        %v1207 = vlaneseq
        %v1208 = vshrl.u32 %v1207, 7
        %v1209 = vsub.s32 %v1206, %v1208
        %v1210 = vrot.slane %v1202, %v1209
        %v1212 = vunpack.c.l.s4 1934713408
        %v1213 = vunpack.c.0.s8 %v1212
        %v1214 = vlaneseq
        %v1215 = vshrl.u32 %v1214, 7
        %v1216 = vsub.s32 %v1213, %v1215
        %v1217 = vrot.slane %v1203, %v1216
        %v1218 = vcombine.high %v1194, 0.0
        %v1219 = vcombine.high %v1201, 0.0
        %v1220 = vcombine.high %v1210, 0.0
        %v1221 = vcombine.high %v1217, 0.0
        %v1222 = vcombine.low %v1194, %v1201
        %v1224 = vunpack.c.l.s4 1983009808
        %v1225 = vunpack.c.0.s8 %v1224
        %v1226 = vlaneseq
        %v1227 = vshrl.u32 %v1226, 7
        %v1228 = vsub.s32 %v1225, %v1227
        %v1229 = vrot.slane %v1222, %v1228
        %v1230 = vcombine.low %v1218, %v1219
        %v1232 = vunpack.c.l.s4 1983009808
        %v1233 = vunpack.c.0.s8 %v1232
        %v1234 = vlaneseq
        %v1235 = vshrl.u32 %v1234, 7
        %v1236 = vsub.s32 %v1233, %v1235
        %v1237 = vrot.slane %v1230, %v1236
        %v1238 = vcombine.low %v1210, %v1217
        %v1240 = vunpack.c.l.s4 1983009808
        %v1241 = vunpack.c.0.s8 %v1240
        %v1242 = vlaneseq
        %v1243 = vshrl.u32 %v1242, 7
        %v1244 = vsub.s32 %v1241, %v1243
        %v1245 = vrot.slane %v1238, %v1244
        %v1246 = vcombine.low %v1220, %v1221
        %v1248 = vunpack.c.l.s4 1983009808
        %v1249 = vunpack.c.0.s8 %v1248
        %v1250 = vlaneseq
        %v1251 = vshrl.u32 %v1250, 7
        %v1252 = vsub.s32 %v1249, %v1251
        %v1253 = vrot.slane %v1246, %v1252
        %v1254 = vcombine.low %v1229, %v1237
        %v1255 = vcombine.high %v1229, %v1237
        %v1257 = vunpack.c.l.s4 1934713408
        %v1258 = vunpack.c.0.s8 %v1257
        %v1259 = vlaneseq
        %v1260 = vshrl.u32 %v1259, 7
        %v1261 = vsub.s32 %v1258, %v1260
        %v1262 = vrot.slane %v1254, %v1261
        %v1264 = vunpack.c.l.s4 1934713408
        %v1265 = vunpack.c.0.s8 %v1264
        %v1266 = vlaneseq
        %v1267 = vshrl.u32 %v1266, 7
        %v1268 = vsub.s32 %v1265, %v1267
        %v1269 = vrot.slane %v1255, %v1268
        %v1270 = vcombine.low %v1245, %v1253
        %v1271 = vcombine.high %v1245, %v1253
        %v1273 = vunpack.c.l.s4 1934713408
        %v1274 = vunpack.c.0.s8 %v1273
        %v1275 = vlaneseq
        %v1276 = vshrl.u32 %v1275, 7
        %v1277 = vsub.s32 %v1274, %v1276
        %v1278 = vrot.slane %v1270, %v1277
        %v1280 = vunpack.c.l.s4 1934713408
        %v1281 = vunpack.c.0.s8 %v1280
        %v1282 = vlaneseq
        %v1283 = vshrl.u32 %v1282, 7
        %v1284 = vsub.s32 %v1281, %v1283
        %v1285 = vrot.slane %v1271, %v1284
        %v1286 = vcombine.low %v1262, %v1278
        %v1287 = vcombine.high %v1262, %v1278
        %v1288 = vcombine.low %v1269, %v1285
        %v1289 = vcombine.high %v1269, %v1285
        %vm1290 = vcmask 64512
        %v1292 = vsel %vm1290, %v992, 0
        %v1295 = vsel %vm1290, %v1139, 0
        %1297 = vmatprep.subr.mxu0 0.0
        %1298 = vmatpush1.xpose.msra.mxu0 %v1295
        %1299 = vmatprep.subr.mxu0 0.0
        %1300 = vmatpush1.xpose.msra.mxu0 0.0
        %1301 = vmatprep.subr.mxu0 0.0
        %1302 = vmatpush1.xpose.msra.mxu0 0.0
        %1303 = vmatprep.subr.mxu0 0.0
        %1304 = vmatpush1.xpose.msra.mxu0 0.0
        %1305 = vmatprep.subr.mxu0 0.0
        %1306 = vmatpush1.xpose.msra.mxu0 0.0
        %1307 = vmatprep.subr.mxu0 0.0
        %1308 = vmatpush1.xpose.msra.mxu0 0.0
        %1309 = vmatprep.subr.mxu0 0.0
        %1310 = vmatpush1.xpose.msra.mxu0 0.0
        %1311 = vmatprep.subr.mxu0 0.0
        %1312 = vmatpush1.xpose.msra.mxu0 0.0
        %1313 = vmatprep.subr.mxu0 0.0
        %1314 = vmatpush1.xpose.msra.mxu0 0.0
        %1315 = vmatprep.subr.mxu0 0.0
        %1316 = vmatpush1.xpose.msra.mxu0 0.0
        %1317 = vmatprep.subr.mxu0 0.0
        %1318 = vmatpush1.xpose.msra.mxu0 0.0
        %1319 = vmatprep.subr.mxu0 0.0
        %1320 = vmatpush1.xpose.msra.mxu0 0.0
        %1321 = vmatprep.subr.mxu0 0.0
        %1322 = vmatpush1.xpose.msra.mxu0 0.0
        %1323 = vmatprep.subr.mxu0 0.0
        %1324 = vmatpush1.xpose.msra.mxu0 0.0
        %1325 = vmatprep.subr.mxu0 0.0
        %1326 = vmatpush1.xpose.msra.mxu0 0.0
        %1327 = vmatprep.subr.mxu0 0.0
        %1328 = vmatpush1.xpose.msra.mxu0 0.0
        %1329 = vmatprep.subr.mxu0 0.0
        %1330 = vmatpush1.xpose.msra.mxu0 0.0
        %1331 = vmatprep.subr.mxu0 0.0
        %1332 = vmatpush1.xpose.msra.mxu0 0.0
        %1333 = vmatprep.subr.mxu0 0.0
        %1334 = vmatpush1.xpose.msra.mxu0 0.0
        %1335 = vmatprep.subr.mxu0 0.0
        %1336 = vmatpush1.xpose.msra.mxu0 0.0
        %1337 = vmatprep.subr.mxu0 0.0
        %1338 = vmatpush1.xpose.msra.mxu0 0.0
        %1339 = vmatprep.subr.mxu0 0.0
        %1340 = vmatpush1.xpose.msra.mxu0 0.0
        %1341 = vmatprep.subr.mxu0 0.0
        %1342 = vmatpush1.xpose.msra.mxu0 0.0
        %1343 = vmatprep.subr.mxu0 0.0
        %1344 = vmatpush1.xpose.msra.mxu0 0.0
        %1345 = vmatprep.subr.mxu0 0.0
        %1346 = vmatpush1.xpose.msra.mxu0 0.0
        %1347 = vmatprep.subr.mxu0 0.0
        %1348 = vmatpush1.xpose.msra.mxu0 0.0
        %1349 = vmatprep.subr.mxu0 0.0
        %1350 = vmatpush1.xpose.msra.mxu0 0.0
        %1351 = vmatprep.subr.mxu0 0.0
        %1352 = vmatpush1.xpose.msra.mxu0 0.0
        %1353 = vmatprep.subr.mxu0 0.0
        %1354 = vmatpush1.xpose.msra.mxu0 0.0
        %1355 = vmatprep.subr.mxu0 0.0
        %1356 = vmatpush1.xpose.msra.mxu0 0.0
        %1357 = vmatprep.subr.mxu0 0.0
        %1358 = vmatpush1.xpose.msra.mxu0 0.0
        %1359 = vmatprep.subr.mxu0 0.0
        %1360 = vmatpush1.xpose.msra.mxu0 0.0
        %1361 = vmatprep.mubr.f32.mxu0 0.0
        %1362 = vmatmul.mubr.f32.gmra.mrb[0].mxu0 %v1292
        %v1363 = vpop.f32.mrb[0].mxu0
        %v1364 = vadd.f32 0.0, %v1363
        %v1365 = vpop.f32.mrb[0].mxu0
        %1366 = vdwg.mxu0
        %v1368 = vsel %vm1290, %v993, 0
        %v1371 = vsel %vm1290, %v1140, 0
        %1373 = vmatprep.subr.mxu0 0.0
        %1374 = vmatpush1.xpose.msra.mxu0 %v1371
        %1375 = vmatprep.subr.mxu0 0.0
        %1376 = vmatpush1.xpose.msra.mxu0 0.0
        %1377 = vmatprep.subr.mxu0 0.0
        %1378 = vmatpush1.xpose.msra.mxu0 0.0
        %1379 = vmatprep.subr.mxu0 0.0
        %1380 = vmatpush1.xpose.msra.mxu0 0.0
        %1381 = vmatprep.subr.mxu0 0.0
        %1382 = vmatpush1.xpose.msra.mxu0 0.0
        %1383 = vmatprep.subr.mxu0 0.0
        %1384 = vmatpush1.xpose.msra.mxu0 0.0
        %1385 = vmatprep.subr.mxu0 0.0
        %1386 = vmatpush1.xpose.msra.mxu0 0.0
        %1387 = vmatprep.subr.mxu0 0.0
        %1388 = vmatpush1.xpose.msra.mxu0 0.0
        %1389 = vmatprep.subr.mxu0 0.0
        %1390 = vmatpush1.xpose.msra.mxu0 0.0
        %1391 = vmatprep.subr.mxu0 0.0
        %1392 = vmatpush1.xpose.msra.mxu0 0.0
        %1393 = vmatprep.subr.mxu0 0.0
        %1394 = vmatpush1.xpose.msra.mxu0 0.0
        %1395 = vmatprep.subr.mxu0 0.0
        %1396 = vmatpush1.xpose.msra.mxu0 0.0
        %1397 = vmatprep.subr.mxu0 0.0
        %1398 = vmatpush1.xpose.msra.mxu0 0.0
        %1399 = vmatprep.subr.mxu0 0.0
        %1400 = vmatpush1.xpose.msra.mxu0 0.0
        %1401 = vmatprep.subr.mxu0 0.0
        %1402 = vmatpush1.xpose.msra.mxu0 0.0
        %1403 = vmatprep.subr.mxu0 0.0
        %1404 = vmatpush1.xpose.msra.mxu0 0.0
        %1405 = vmatprep.subr.mxu0 0.0
        %1406 = vmatpush1.xpose.msra.mxu0 0.0
        %1407 = vmatprep.subr.mxu0 0.0
        %1408 = vmatpush1.xpose.msra.mxu0 0.0
        %1409 = vmatprep.subr.mxu0 0.0
        %1410 = vmatpush1.xpose.msra.mxu0 0.0
        %1411 = vmatprep.subr.mxu0 0.0
        %1412 = vmatpush1.xpose.msra.mxu0 0.0
        %1413 = vmatprep.subr.mxu0 0.0
        %1414 = vmatpush1.xpose.msra.mxu0 0.0
        %1415 = vmatprep.subr.mxu0 0.0
        %1416 = vmatpush1.xpose.msra.mxu0 0.0
        %1417 = vmatprep.subr.mxu0 0.0
        %1418 = vmatpush1.xpose.msra.mxu0 0.0
        %1419 = vmatprep.subr.mxu0 0.0
        %1420 = vmatpush1.xpose.msra.mxu0 0.0
        %1421 = vmatprep.subr.mxu0 0.0
        %1422 = vmatpush1.xpose.msra.mxu0 0.0
        %1423 = vmatprep.subr.mxu0 0.0
        %1424 = vmatpush1.xpose.msra.mxu0 0.0
        %1425 = vmatprep.subr.mxu0 0.0
        %1426 = vmatpush1.xpose.msra.mxu0 0.0
        %1427 = vmatprep.subr.mxu0 0.0
        %1428 = vmatpush1.xpose.msra.mxu0 0.0
        %1429 = vmatprep.subr.mxu0 0.0
        %1430 = vmatpush1.xpose.msra.mxu0 0.0
        %1431 = vmatprep.subr.mxu0 0.0
        %1432 = vmatpush1.xpose.msra.mxu0 0.0
        %1433 = vmatprep.subr.mxu0 0.0
        %1434 = vmatpush1.xpose.msra.mxu0 0.0
        %1435 = vmatprep.subr.mxu0 0.0
        %1436 = vmatpush1.xpose.msra.mxu0 0.0
        %1437 = vmatprep.mubr.f32.mxu0 0.0
        %1438 = vmatmul.mubr.f32.gmra.mrb[0].mxu0 %v1368
        %v1439 = vpop.f32.mrb[0].mxu0
        %v1440 = vadd.f32 0.0, %v1439
        %v1441 = vpop.f32.mrb[0].mxu0
        %1442 = vdwg.mxu0
        %v1444 = vsel %vm1290, %v994, 0
        %v1447 = vsel %vm1290, %v1141, 0
        %1449 = vmatprep.subr.mxu0 0.0
        %1450 = vmatpush1.xpose.msra.mxu0 %v1447
        %1451 = vmatprep.subr.mxu0 0.0
        %1452 = vmatpush1.xpose.msra.mxu0 0.0
        %1453 = vmatprep.subr.mxu0 0.0
        %1454 = vmatpush1.xpose.msra.mxu0 0.0
        %1455 = vmatprep.subr.mxu0 0.0
        %1456 = vmatpush1.xpose.msra.mxu0 0.0
        %1457 = vmatprep.subr.mxu0 0.0
        %1458 = vmatpush1.xpose.msra.mxu0 0.0
        %1459 = vmatprep.subr.mxu0 0.0
        %1460 = vmatpush1.xpose.msra.mxu0 0.0
        %1461 = vmatprep.subr.mxu0 0.0
        %1462 = vmatpush1.xpose.msra.mxu0 0.0
        %1463 = vmatprep.subr.mxu0 0.0
        %1464 = vmatpush1.xpose.msra.mxu0 0.0
        %1465 = vmatprep.subr.mxu0 0.0
        %1466 = vmatpush1.xpose.msra.mxu0 0.0
        %1467 = vmatprep.subr.mxu0 0.0
        %1468 = vmatpush1.xpose.msra.mxu0 0.0
        %1469 = vmatprep.subr.mxu0 0.0
        %1470 = vmatpush1.xpose.msra.mxu0 0.0
        %1471 = vmatprep.subr.mxu0 0.0
        %1472 = vmatpush1.xpose.msra.mxu0 0.0
        %1473 = vmatprep.subr.mxu0 0.0
        %1474 = vmatpush1.xpose.msra.mxu0 0.0
        %1475 = vmatprep.subr.mxu0 0.0
        %1476 = vmatpush1.xpose.msra.mxu0 0.0
        %1477 = vmatprep.subr.mxu0 0.0
        %1478 = vmatpush1.xpose.msra.mxu0 0.0
        %1479 = vmatprep.subr.mxu0 0.0
        %1480 = vmatpush1.xpose.msra.mxu0 0.0
        %1481 = vmatprep.subr.mxu0 0.0
        %1482 = vmatpush1.xpose.msra.mxu0 0.0
        %1483 = vmatprep.subr.mxu0 0.0
        %1484 = vmatpush1.xpose.msra.mxu0 0.0
        %1485 = vmatprep.subr.mxu0 0.0
        %1486 = vmatpush1.xpose.msra.mxu0 0.0
        %1487 = vmatprep.subr.mxu0 0.0
        %1488 = vmatpush1.xpose.msra.mxu0 0.0
        %1489 = vmatprep.subr.mxu0 0.0
        %1490 = vmatpush1.xpose.msra.mxu0 0.0
        %1491 = vmatprep.subr.mxu0 0.0
        %1492 = vmatpush1.xpose.msra.mxu0 0.0
        %1493 = vmatprep.subr.mxu0 0.0
        %1494 = vmatpush1.xpose.msra.mxu0 0.0
        %1495 = vmatprep.subr.mxu0 0.0
        %1496 = vmatpush1.xpose.msra.mxu0 0.0
        %1497 = vmatprep.subr.mxu0 0.0
        %1498 = vmatpush1.xpose.msra.mxu0 0.0
        %1499 = vmatprep.subr.mxu0 0.0
        %1500 = vmatpush1.xpose.msra.mxu0 0.0
        %1501 = vmatprep.subr.mxu0 0.0
        %1502 = vmatpush1.xpose.msra.mxu0 0.0
        %1503 = vmatprep.subr.mxu0 0.0
        %1504 = vmatpush1.xpose.msra.mxu0 0.0
        %1505 = vmatprep.subr.mxu0 0.0
        %1506 = vmatpush1.xpose.msra.mxu0 0.0
        %1507 = vmatprep.subr.mxu0 0.0
        %1508 = vmatpush1.xpose.msra.mxu0 0.0
        %1509 = vmatprep.subr.mxu0 0.0
        %1510 = vmatpush1.xpose.msra.mxu0 0.0
        %1511 = vmatprep.subr.mxu0 0.0
        %1512 = vmatpush1.xpose.msra.mxu0 0.0
        %1513 = vmatprep.mubr.f32.mxu0 0.0
        %1514 = vmatmul.mubr.f32.gmra.mrb[0].mxu0 %v1444
        %v1515 = vpop.f32.mrb[0].mxu0
        %v1516 = vadd.f32 0.0, %v1515
        %v1517 = vpop.f32.mrb[0].mxu0
        %1518 = vdwg.mxu0
        %v1520 = vsel %vm1290, %v995, 0
        %v1523 = vsel %vm1290, %v1142, 0
        %1525 = vmatprep.subr.mxu0 0.0
        %1526 = vmatpush1.xpose.msra.mxu0 %v1523
        %1527 = vmatprep.subr.mxu0 0.0
        %1528 = vmatpush1.xpose.msra.mxu0 0.0
        %1529 = vmatprep.subr.mxu0 0.0
        %1530 = vmatpush1.xpose.msra.mxu0 0.0
        %1531 = vmatprep.subr.mxu0 0.0
        %1532 = vmatpush1.xpose.msra.mxu0 0.0
        %1533 = vmatprep.subr.mxu0 0.0
        %1534 = vmatpush1.xpose.msra.mxu0 0.0
        %1535 = vmatprep.subr.mxu0 0.0
        %1536 = vmatpush1.xpose.msra.mxu0 0.0
        %1537 = vmatprep.subr.mxu0 0.0
        %1538 = vmatpush1.xpose.msra.mxu0 0.0
        %1539 = vmatprep.subr.mxu0 0.0
        %1540 = vmatpush1.xpose.msra.mxu0 0.0
        %1541 = vmatprep.subr.mxu0 0.0
        %1542 = vmatpush1.xpose.msra.mxu0 0.0
        %1543 = vmatprep.subr.mxu0 0.0
        %1544 = vmatpush1.xpose.msra.mxu0 0.0
        %1545 = vmatprep.subr.mxu0 0.0
        %1546 = vmatpush1.xpose.msra.mxu0 0.0
        %1547 = vmatprep.subr.mxu0 0.0
        %1548 = vmatpush1.xpose.msra.mxu0 0.0
        %1549 = vmatprep.subr.mxu0 0.0
        %1550 = vmatpush1.xpose.msra.mxu0 0.0
        %1551 = vmatprep.subr.mxu0 0.0
        %1552 = vmatpush1.xpose.msra.mxu0 0.0
        %1553 = vmatprep.subr.mxu0 0.0
        %1554 = vmatpush1.xpose.msra.mxu0 0.0
        %1555 = vmatprep.subr.mxu0 0.0
        %1556 = vmatpush1.xpose.msra.mxu0 0.0
        %1557 = vmatprep.subr.mxu0 0.0
        %1558 = vmatpush1.xpose.msra.mxu0 0.0
        %1559 = vmatprep.subr.mxu0 0.0
        %1560 = vmatpush1.xpose.msra.mxu0 0.0
        %1561 = vmatprep.subr.mxu0 0.0
        %1562 = vmatpush1.xpose.msra.mxu0 0.0
        %1563 = vmatprep.subr.mxu0 0.0
        %1564 = vmatpush1.xpose.msra.mxu0 0.0
        %1565 = vmatprep.subr.mxu0 0.0
        %1566 = vmatpush1.xpose.msra.mxu0 0.0
        %1567 = vmatprep.subr.mxu0 0.0
        %1568 = vmatpush1.xpose.msra.mxu0 0.0
        %1569 = vmatprep.subr.mxu0 0.0
        %1570 = vmatpush1.xpose.msra.mxu0 0.0
        %1571 = vmatprep.subr.mxu0 0.0
        %1572 = vmatpush1.xpose.msra.mxu0 0.0
        %1573 = vmatprep.subr.mxu0 0.0
        %1574 = vmatpush1.xpose.msra.mxu0 0.0
        %1575 = vmatprep.subr.mxu0 0.0
        %1576 = vmatpush1.xpose.msra.mxu0 0.0
        %1577 = vmatprep.subr.mxu0 0.0
        %1578 = vmatpush1.xpose.msra.mxu0 0.0
        %1579 = vmatprep.subr.mxu0 0.0
        %1580 = vmatpush1.xpose.msra.mxu0 0.0
        %1581 = vmatprep.subr.mxu0 0.0
        %1582 = vmatpush1.xpose.msra.mxu0 0.0
        %1583 = vmatprep.subr.mxu0 0.0
        %1584 = vmatpush1.xpose.msra.mxu0 0.0
        %1585 = vmatprep.subr.mxu0 0.0
        %1586 = vmatpush1.xpose.msra.mxu0 0.0
        %1587 = vmatprep.subr.mxu0 0.0
        %1588 = vmatpush1.xpose.msra.mxu0 0.0
        %1589 = vmatprep.mubr.f32.mxu0 0.0
        %1590 = vmatmul.mubr.f32.gmra.mrb[0].mxu0 %v1520
        %v1591 = vpop.f32.mrb[0].mxu0
        %v1592 = vadd.f32 0.0, %v1591
        %v1593 = vpop.f32.mrb[0].mxu0
        %1594 = vdwg.mxu0
        %v1595 = vsel %vm1290, %v1364, -inf
        %1596 = vmax.xlane.f32.xlu0 %v1595
        %v1597 = vpop.xlane.xlu0 %1596
        %v1598 = vsel %vm1290, %v1440, -inf
        %1599 = vmax.xlane.f32.xlu0 %v1598
        %v1600 = vpop.xlane.xlu0 %1599
        %v1601 = vsel %vm1290, %v1516, -inf
        %1602 = vmax.xlane.f32.xlu0 %v1601
        %v1603 = vpop.xlane.xlu0 %1602
        %v1604 = vsel %vm1290, %v1592, -inf
        %1605 = vmax.xlane.f32.xlu0 %v1604
        %v1606 = vpop.xlane.xlu0 %1605
        %v1607 = vsub.f32 %v1364, %v1597
        %v1608 = vsub.f32 %v1440, %v1600
        %v1609 = vsub.f32 %v1516, %v1603
        %v1610 = vsub.f32 %v1592, %v1606
        %v1611 = vmul.f32 %v1607, 1.442695
        %v1612 = vpow.pop %v1611
        %v1613 = vmul.f32 %v1608, 1.442695
        %v1614 = vpow.pop %v1613
        %v1615 = vmul.f32 %v1609, 1.442695
        %v1616 = vpow.pop %v1615
        %v1617 = vmul.f32 %v1610, 1.442695
        %v1618 = vpow.pop %v1617
        %v1619 = vsel %vm1290, %v1612, 0.0
        %1620 = vadd.xlane.f32.xlu0 %v1619
        %v1621 = vpop.xlane.xlu0 %1620
        %v1622 = vsel %vm1290, %v1614, 0.0
        %1623 = vadd.xlane.f32.xlu0 %v1622
        %v1624 = vpop.xlane.xlu0 %1623
        %v1625 = vsel %vm1290, %v1616, 0.0
        %1626 = vadd.xlane.f32.xlu0 %v1625
        %v1627 = vpop.xlane.xlu0 %1626
        %v1628 = vsel %vm1290, %v1618, 0.0
        %1629 = vadd.xlane.f32.xlu0 %v1628
        %v1630 = vpop.xlane.xlu0 %1629
        %v1632 = vsel %vm1290, %v1612, 0
        %1634 = vmatprep.subr.mxu0 0.0
        %1635 = vmatpush1.msra.mxu0 %v1286
        %1636 = vmatprep.subr.mxu0 0.0
        %1637 = vmatpush1.msra.mxu0 0.0
        %1638 = vmatprep.subr.mxu0 0.0
        %1639 = vmatpush1.msra.mxu0 0.0
        %1640 = vmatprep.subr.mxu0 0.0
        %1641 = vmatpush1.msra.mxu0 0.0
        %1642 = vmatprep.subr.mxu0 0.0
        %1643 = vmatpush1.msra.mxu0 0.0
        %1644 = vmatprep.subr.mxu0 0.0
        %1645 = vmatpush1.msra.mxu0 0.0
        %1646 = vmatprep.subr.mxu0 0.0
        %1647 = vmatpush1.msra.mxu0 0.0
        %1648 = vmatprep.subr.mxu0 0.0
        %1649 = vmatpush1.msra.mxu0 0.0
        %1650 = vmatprep.subr.mxu0 0.0
        %1651 = vmatpush1.msra.mxu0 0.0
        %1652 = vmatprep.subr.mxu0 0.0
        %1653 = vmatpush1.msra.mxu0 0.0
        %1654 = vmatprep.subr.mxu0 0.0
        %1655 = vmatpush1.msra.mxu0 0.0
        %1656 = vmatprep.subr.mxu0 0.0
        %1657 = vmatpush1.msra.mxu0 0.0
        %1658 = vmatprep.subr.mxu0 0.0
        %1659 = vmatpush1.msra.mxu0 0.0
        %1660 = vmatprep.subr.mxu0 0.0
        %1661 = vmatpush1.msra.mxu0 0.0
        %1662 = vmatprep.subr.mxu0 0.0
        %1663 = vmatpush1.msra.mxu0 0.0
        %1664 = vmatprep.subr.mxu0 0.0
        %1665 = vmatpush1.msra.mxu0 0.0
        %1666 = vmatprep.subr.mxu0 0.0
        %1667 = vmatpush1.msra.mxu0 0.0
        %1668 = vmatprep.subr.mxu0 0.0
        %1669 = vmatpush1.msra.mxu0 0.0
        %1670 = vmatprep.subr.mxu0 0.0
        %1671 = vmatpush1.msra.mxu0 0.0
        %1672 = vmatprep.subr.mxu0 0.0
        %1673 = vmatpush1.msra.mxu0 0.0
        %1674 = vmatprep.subr.mxu0 0.0
        %1675 = vmatpush1.msra.mxu0 0.0
        %1676 = vmatprep.subr.mxu0 0.0
        %1677 = vmatpush1.msra.mxu0 0.0
        %1678 = vmatprep.subr.mxu0 0.0
        %1679 = vmatpush1.msra.mxu0 0.0
        %1680 = vmatprep.subr.mxu0 0.0
        %1681 = vmatpush1.msra.mxu0 0.0
        %1682 = vmatprep.subr.mxu0 0.0
        %1683 = vmatpush1.msra.mxu0 0.0
        %1684 = vmatprep.subr.mxu0 0.0
        %1685 = vmatpush1.msra.mxu0 0.0
        %1686 = vmatprep.subr.mxu0 0.0
        %1687 = vmatpush1.msra.mxu0 0.0
        %1688 = vmatprep.subr.mxu0 0.0
        %1689 = vmatpush1.msra.mxu0 0.0
        %1690 = vmatprep.subr.mxu0 0.0
        %1691 = vmatpush1.msra.mxu0 0.0
        %1692 = vmatprep.subr.mxu0 0.0
        %1693 = vmatpush1.msra.mxu0 0.0
        %1694 = vmatprep.subr.mxu0 0.0
        %1695 = vmatpush1.msra.mxu0 0.0
        %1696 = vmatprep.subr.mxu0 0.0
        %1697 = vmatpush1.msra.mxu0 0.0
        %1698 = vmatprep.mubr.f32.mxu0 0.0
        %1699 = vmatmul.mubr.f32.gmra.mrb[0].mxu0 %v1632
        %v1700 = vpop.f32.mrb[0].mxu0
        %v1701 = vadd.f32 0.0, %v1700
        %v1702 = vpop.f32.mrb[0].mxu0
        %1703 = vdwg.mxu0
        %v1705 = vsel %vm1290, %v1614, 0
        %1707 = vmatprep.subr.mxu0 0.0
        %1708 = vmatpush1.msra.mxu0 %v1287
        %1709 = vmatprep.subr.mxu0 0.0
        %1710 = vmatpush1.msra.mxu0 0.0
        %1711 = vmatprep.subr.mxu0 0.0
        %1712 = vmatpush1.msra.mxu0 0.0
        %1713 = vmatprep.subr.mxu0 0.0
        %1714 = vmatpush1.msra.mxu0 0.0
        %1715 = vmatprep.subr.mxu0 0.0
        %1716 = vmatpush1.msra.mxu0 0.0
        %1717 = vmatprep.subr.mxu0 0.0
        %1718 = vmatpush1.msra.mxu0 0.0
        %1719 = vmatprep.subr.mxu0 0.0
        %1720 = vmatpush1.msra.mxu0 0.0
        %1721 = vmatprep.subr.mxu0 0.0
        %1722 = vmatpush1.msra.mxu0 0.0
        %1723 = vmatprep.subr.mxu0 0.0
        %1724 = vmatpush1.msra.mxu0 0.0
        %1725 = vmatprep.subr.mxu0 0.0
        %1726 = vmatpush1.msra.mxu0 0.0
        %1727 = vmatprep.subr.mxu0 0.0
        %1728 = vmatpush1.msra.mxu0 0.0
        %1729 = vmatprep.subr.mxu0 0.0
        %1730 = vmatpush1.msra.mxu0 0.0
        %1731 = vmatprep.subr.mxu0 0.0
        %1732 = vmatpush1.msra.mxu0 0.0
        %1733 = vmatprep.subr.mxu0 0.0
        %1734 = vmatpush1.msra.mxu0 0.0
        %1735 = vmatprep.subr.mxu0 0.0
        %1736 = vmatpush1.msra.mxu0 0.0
        %1737 = vmatprep.subr.mxu0 0.0
        %1738 = vmatpush1.msra.mxu0 0.0
        %1739 = vmatprep.subr.mxu0 0.0
        %1740 = vmatpush1.msra.mxu0 0.0
        %1741 = vmatprep.subr.mxu0 0.0
        %1742 = vmatpush1.msra.mxu0 0.0
        %1743 = vmatprep.subr.mxu0 0.0
        %1744 = vmatpush1.msra.mxu0 0.0
        %1745 = vmatprep.subr.mxu0 0.0
        %1746 = vmatpush1.msra.mxu0 0.0
        %1747 = vmatprep.subr.mxu0 0.0
        %1748 = vmatpush1.msra.mxu0 0.0
        %1749 = vmatprep.subr.mxu0 0.0
        %1750 = vmatpush1.msra.mxu0 0.0
        %1751 = vmatprep.subr.mxu0 0.0
        %1752 = vmatpush1.msra.mxu0 0.0
        %1753 = vmatprep.subr.mxu0 0.0
        %1754 = vmatpush1.msra.mxu0 0.0
        %1755 = vmatprep.subr.mxu0 0.0
        %1756 = vmatpush1.msra.mxu0 0.0
        %1757 = vmatprep.subr.mxu0 0.0
        %1758 = vmatpush1.msra.mxu0 0.0
        %1759 = vmatprep.subr.mxu0 0.0
        %1760 = vmatpush1.msra.mxu0 0.0
        %1761 = vmatprep.subr.mxu0 0.0
        %1762 = vmatpush1.msra.mxu0 0.0
        %1763 = vmatprep.subr.mxu0 0.0
        %1764 = vmatpush1.msra.mxu0 0.0
        %1765 = vmatprep.subr.mxu0 0.0
        %1766 = vmatpush1.msra.mxu0 0.0
        %1767 = vmatprep.subr.mxu0 0.0
        %1768 = vmatpush1.msra.mxu0 0.0
        %1769 = vmatprep.subr.mxu0 0.0
        %1770 = vmatpush1.msra.mxu0 0.0
        %1771 = vmatprep.mubr.f32.mxu0 0.0
        %1772 = vmatmul.mubr.f32.gmra.mrb[0].mxu0 %v1705
        %v1773 = vpop.f32.mrb[0].mxu0
        %v1774 = vadd.f32 0.0, %v1773
        %v1775 = vpop.f32.mrb[0].mxu0
        %1776 = vdwg.mxu0
        %v1778 = vsel %vm1290, %v1616, 0
        %1780 = vmatprep.subr.mxu0 0.0
        %1781 = vmatpush1.msra.mxu0 %v1288
        %1782 = vmatprep.subr.mxu0 0.0
        %1783 = vmatpush1.msra.mxu0 0.0
        %1784 = vmatprep.subr.mxu0 0.0
        %1785 = vmatpush1.msra.mxu0 0.0
        %1786 = vmatprep.subr.mxu0 0.0
        %1787 = vmatpush1.msra.mxu0 0.0
        %1788 = vmatprep.subr.mxu0 0.0
        %1789 = vmatpush1.msra.mxu0 0.0
        %1790 = vmatprep.subr.mxu0 0.0
        %1791 = vmatpush1.msra.mxu0 0.0
        %1792 = vmatprep.subr.mxu0 0.0
        %1793 = vmatpush1.msra.mxu0 0.0
        %1794 = vmatprep.subr.mxu0 0.0
        %1795 = vmatpush1.msra.mxu0 0.0
        %1796 = vmatprep.subr.mxu0 0.0
        %1797 = vmatpush1.msra.mxu0 0.0
        %1798 = vmatprep.subr.mxu0 0.0
        %1799 = vmatpush1.msra.mxu0 0.0
        %1800 = vmatprep.subr.mxu0 0.0
        %1801 = vmatpush1.msra.mxu0 0.0
        %1802 = vmatprep.subr.mxu0 0.0
        %1803 = vmatpush1.msra.mxu0 0.0
        %1804 = vmatprep.subr.mxu0 0.0
        %1805 = vmatpush1.msra.mxu0 0.0
        %1806 = vmatprep.subr.mxu0 0.0
        %1807 = vmatpush1.msra.mxu0 0.0
        %1808 = vmatprep.subr.mxu0 0.0
        %1809 = vmatpush1.msra.mxu0 0.0
        %1810 = vmatprep.subr.mxu0 0.0
        %1811 = vmatpush1.msra.mxu0 0.0
        %1812 = vmatprep.subr.mxu0 0.0
        %1813 = vmatpush1.msra.mxu0 0.0
        %1814 = vmatprep.subr.mxu0 0.0
        %1815 = vmatpush1.msra.mxu0 0.0
        %1816 = vmatprep.subr.mxu0 0.0
        %1817 = vmatpush1.msra.mxu0 0.0
        %1818 = vmatprep.subr.mxu0 0.0
        %1819 = vmatpush1.msra.mxu0 0.0
        %1820 = vmatprep.subr.mxu0 0.0
        %1821 = vmatpush1.msra.mxu0 0.0
        %1822 = vmatprep.subr.mxu0 0.0
        %1823 = vmatpush1.msra.mxu0 0.0
        %1824 = vmatprep.subr.mxu0 0.0
        %1825 = vmatpush1.msra.mxu0 0.0
        %1826 = vmatprep.subr.mxu0 0.0
        %1827 = vmatpush1.msra.mxu0 0.0
        %1828 = vmatprep.subr.mxu0 0.0
        %1829 = vmatpush1.msra.mxu0 0.0
        %1830 = vmatprep.subr.mxu0 0.0
        %1831 = vmatpush1.msra.mxu0 0.0
        %1832 = vmatprep.subr.mxu0 0.0
        %1833 = vmatpush1.msra.mxu0 0.0
        %1834 = vmatprep.subr.mxu0 0.0
        %1835 = vmatpush1.msra.mxu0 0.0
        %1836 = vmatprep.subr.mxu0 0.0
        %1837 = vmatpush1.msra.mxu0 0.0
        %1838 = vmatprep.subr.mxu0 0.0
        %1839 = vmatpush1.msra.mxu0 0.0
        %1840 = vmatprep.subr.mxu0 0.0
        %1841 = vmatpush1.msra.mxu0 0.0
        %1842 = vmatprep.subr.mxu0 0.0
        %1843 = vmatpush1.msra.mxu0 0.0
        %1844 = vmatprep.mubr.f32.mxu0 0.0
        %1845 = vmatmul.mubr.f32.gmra.mrb[0].mxu0 %v1778
        %v1846 = vpop.f32.mrb[0].mxu0
        %v1847 = vadd.f32 0.0, %v1846
        %v1848 = vpop.f32.mrb[0].mxu0
        %1849 = vdwg.mxu0
        %v1851 = vsel %vm1290, %v1618, 0
        %1853 = vmatprep.subr.mxu0 0.0
        %1854 = vmatpush1.msra.mxu0 %v1289
        %1855 = vmatprep.subr.mxu0 0.0
        %1856 = vmatpush1.msra.mxu0 0.0
        %1857 = vmatprep.subr.mxu0 0.0
        %1858 = vmatpush1.msra.mxu0 0.0
        %1859 = vmatprep.subr.mxu0 0.0
        %1860 = vmatpush1.msra.mxu0 0.0
        %1861 = vmatprep.subr.mxu0 0.0
        %1862 = vmatpush1.msra.mxu0 0.0
        %1863 = vmatprep.subr.mxu0 0.0
        %1864 = vmatpush1.msra.mxu0 0.0
        %1865 = vmatprep.subr.mxu0 0.0
        %1866 = vmatpush1.msra.mxu0 0.0
        %1867 = vmatprep.subr.mxu0 0.0
        %1868 = vmatpush1.msra.mxu0 0.0
        %1869 = vmatprep.subr.mxu0 0.0
        %1870 = vmatpush1.msra.mxu0 0.0
        %1871 = vmatprep.subr.mxu0 0.0
        %1872 = vmatpush1.msra.mxu0 0.0
        %1873 = vmatprep.subr.mxu0 0.0
        %1874 = vmatpush1.msra.mxu0 0.0
        %1875 = vmatprep.subr.mxu0 0.0
        %1876 = vmatpush1.msra.mxu0 0.0
        %1877 = vmatprep.subr.mxu0 0.0
        %1878 = vmatpush1.msra.mxu0 0.0
        %1879 = vmatprep.subr.mxu0 0.0
        %1880 = vmatpush1.msra.mxu0 0.0
        %1881 = vmatprep.subr.mxu0 0.0
        %1882 = vmatpush1.msra.mxu0 0.0
        %1883 = vmatprep.subr.mxu0 0.0
        %1884 = vmatpush1.msra.mxu0 0.0
        %1885 = vmatprep.subr.mxu0 0.0
        %1886 = vmatpush1.msra.mxu0 0.0
        %1887 = vmatprep.subr.mxu0 0.0
        %1888 = vmatpush1.msra.mxu0 0.0
        %1889 = vmatprep.subr.mxu0 0.0
        %1890 = vmatpush1.msra.mxu0 0.0
        %1891 = vmatprep.subr.mxu0 0.0
        %1892 = vmatpush1.msra.mxu0 0.0
        %1893 = vmatprep.subr.mxu0 0.0
        %1894 = vmatpush1.msra.mxu0 0.0
        %1895 = vmatprep.subr.mxu0 0.0
        %1896 = vmatpush1.msra.mxu0 0.0
        %1897 = vmatprep.subr.mxu0 0.0
        %1898 = vmatpush1.msra.mxu0 0.0
        %1899 = vmatprep.subr.mxu0 0.0
        %1900 = vmatpush1.msra.mxu0 0.0
        %1901 = vmatprep.subr.mxu0 0.0
        %1902 = vmatpush1.msra.mxu0 0.0
        %1903 = vmatprep.subr.mxu0 0.0
        %1904 = vmatpush1.msra.mxu0 0.0
        %1905 = vmatprep.subr.mxu0 0.0
        %1906 = vmatpush1.msra.mxu0 0.0
        %1907 = vmatprep.subr.mxu0 0.0
        %1908 = vmatpush1.msra.mxu0 0.0
        %1909 = vmatprep.subr.mxu0 0.0
        %1910 = vmatpush1.msra.mxu0 0.0
        %1911 = vmatprep.subr.mxu0 0.0
        %1912 = vmatpush1.msra.mxu0 0.0
        %1913 = vmatprep.subr.mxu0 0.0
        %1914 = vmatpush1.msra.mxu0 0.0
        %1915 = vmatprep.subr.mxu0 0.0
        %1916 = vmatpush1.msra.mxu0 0.0
        %1917 = vmatprep.mubr.f32.mxu0 0.0
        %1918 = vmatmul.mubr.f32.gmra.mrb[0].mxu0 %v1851
        %v1919 = vpop.f32.mrb[0].mxu0
        %v1920 = vadd.f32 0.0, %v1919
        %v1921 = vpop.f32.mrb[0].mxu0
        %1922 = vdwg.mxu0
        %v1923 = vrcp.pop %v1621
        %v1924 = vrcp.pop %v1624
        %v1925 = vrcp.pop %v1627
        %v1926 = vrcp.pop %v1630
        %v1927 = vmul.f32 %v1701, %v1923
        %v1928 = vmul.f32 %v1774, %v1924
        %v1929 = vmul.f32 %v1847, %v1925
        %v1930 = vmul.f32 %v1920, %v1926
        %v1931 = vcombine.low %v1927, %v1929
        %v1932 = vcombine.high %v1927, %v1929
        %v1934 = vunpack.c.l.s4 1983009808
        %v1935 = vunpack.c.0.s8 %v1934
        %v1936 = vlaneseq
        %v1937 = vshrl.u32 %v1936, 7
        %v1938 = vsub.s32 %v1935, %v1937
        %v1939 = vrot.slane %v1931, %v1938
        %v1941 = vunpack.c.l.s4 1983009808
        %v1942 = vunpack.c.0.s8 %v1941
        %v1943 = vlaneseq
        %v1944 = vshrl.u32 %v1943, 7
        %v1945 = vsub.s32 %v1942, %v1944
        %v1946 = vrot.slane %v1932, %v1945
        %v1947 = vcombine.low %v1928, %v1930
        %v1948 = vcombine.high %v1928, %v1930
        %v1950 = vunpack.c.l.s4 1983009808
        %v1951 = vunpack.c.0.s8 %v1950
        %v1952 = vlaneseq
        %v1953 = vshrl.u32 %v1952, 7
        %v1954 = vsub.s32 %v1951, %v1953
        %v1955 = vrot.slane %v1947, %v1954
        %v1957 = vunpack.c.l.s4 1983009808
        %v1958 = vunpack.c.0.s8 %v1957
        %v1959 = vlaneseq
        %v1960 = vshrl.u32 %v1959, 7
        %v1961 = vsub.s32 %v1958, %v1960
        %v1962 = vrot.slane %v1948, %v1961
        %v1963 = vcombine.low %v1939, %v1955
        %v1964 = vcombine.high %v1939, %v1955
        %v1966 = vunpack.c.l.s4 1934713408
        %v1967 = vunpack.c.0.s8 %v1966
        %v1968 = vlaneseq
        %v1969 = vshrl.u32 %v1968, 7
        %v1970 = vsub.s32 %v1967, %v1969
        %v1971 = vrot.slane %v1963, %v1970
        %v1973 = vunpack.c.l.s4 1934713408
        %v1974 = vunpack.c.0.s8 %v1973
        %v1975 = vlaneseq
        %v1976 = vshrl.u32 %v1975, 7
        %v1977 = vsub.s32 %v1974, %v1976
        %v1978 = vrot.slane %v1964, %v1977
        %v1979 = vcombine.low %v1946, %v1962
        %v1980 = vcombine.high %v1946, %v1962
        %v1982 = vunpack.c.l.s4 1934713408
        %v1983 = vunpack.c.0.s8 %v1982
        %v1984 = vlaneseq
        %v1985 = vshrl.u32 %v1984, 7
        %v1986 = vsub.s32 %v1983, %v1985
        %v1987 = vrot.slane %v1979, %v1986
        %v1989 = vunpack.c.l.s4 1934713408
        %v1990 = vunpack.c.0.s8 %v1989
        %v1991 = vlaneseq
        %v1992 = vshrl.u32 %v1991, 7
        %v1993 = vsub.s32 %v1990, %v1992
        %v1994 = vrot.slane %v1980, %v1993
        %v1995 = vcombine.high %v1971, 0.0
        %v1996 = vcombine.high %v1978, 0.0
        %v1997 = vcombine.high %v1987, 0.0
        %v1998 = vcombine.high %v1994, 0.0
        %v1999 = vcombine.low %v1971, %v1978
        %v2001 = vunpack.c.l.s4 1983009808
        %v2002 = vunpack.c.0.s8 %v2001
        %v2003 = vlaneseq
        %v2004 = vshrl.u32 %v2003, 7
        %v2005 = vsub.s32 %v2002, %v2004
        %v2006 = vrot.slane %v1999, %v2005
        %v2007 = vcombine.low %v1995, %v1996
        %v2009 = vunpack.c.l.s4 1983009808
        %v2010 = vunpack.c.0.s8 %v2009
        %v2011 = vlaneseq
        %v2012 = vshrl.u32 %v2011, 7
        %v2013 = vsub.s32 %v2010, %v2012
        %v2014 = vrot.slane %v2007, %v2013
        %v2015 = vcombine.low %v1987, %v1994
        %v2017 = vunpack.c.l.s4 1983009808
        %v2018 = vunpack.c.0.s8 %v2017
        %v2019 = vlaneseq
        %v2020 = vshrl.u32 %v2019, 7
        %v2021 = vsub.s32 %v2018, %v2020
        %v2022 = vrot.slane %v2015, %v2021
        %v2023 = vcombine.low %v1997, %v1998
        %v2025 = vunpack.c.l.s4 1983009808
        %v2026 = vunpack.c.0.s8 %v2025
        %v2027 = vlaneseq
        %v2028 = vshrl.u32 %v2027, 7
        %v2029 = vsub.s32 %v2026, %v2028
        %v2030 = vrot.slane %v2023, %v2029
        %v2031 = vcombine.low %v2006, %v2014
        %v2032 = vcombine.high %v2006, %v2014
        %v2034 = vunpack.c.l.s4 1934713408
        %v2035 = vunpack.c.0.s8 %v2034
        %v2036 = vlaneseq
        %v2037 = vshrl.u32 %v2036, 7
        %v2038 = vsub.s32 %v2035, %v2037
        %v2039 = vrot.slane %v2031, %v2038
        %v2041 = vunpack.c.l.s4 1934713408
        %v2042 = vunpack.c.0.s8 %v2041
        %v2043 = vlaneseq
        %v2044 = vshrl.u32 %v2043, 7
        %v2045 = vsub.s32 %v2042, %v2044
        %v2046 = vrot.slane %v2032, %v2045
        %v2047 = vcombine.low %v2022, %v2030
        %v2048 = vcombine.high %v2022, %v2030
        %v2050 = vunpack.c.l.s4 1934713408
        %v2051 = vunpack.c.0.s8 %v2050
        %v2052 = vlaneseq
        %v2053 = vshrl.u32 %v2052, 7
        %v2054 = vsub.s32 %v2051, %v2053
        %v2055 = vrot.slane %v2047, %v2054
        %v2057 = vunpack.c.l.s4 1934713408
        %v2058 = vunpack.c.0.s8 %v2057
        %v2059 = vlaneseq
        %v2060 = vshrl.u32 %v2059, 7
        %v2061 = vsub.s32 %v2058, %v2060
        %v2062 = vrot.slane %v2048, %v2061
        %v2063 = vcombine.low %v2039, %v2055
        %v2064 = vcombine.high %v2039, %v2055
        %v2065 = vcombine.low %v2046, %v2062
        %v2066 = vcombine.high %v2046, %v2062
        %2068 = vrot.lane.b32.xlu0 %v2064, 8
        %v2069 = vpop.permute.xlu0 %2068
        %2072 = vrot.lane.b32.xlu0 %v2065, 16
        %v2073 = vpop.permute.xlu0 %2072
        %2076 = vrot.lane.b32.xlu0 %v2066, 24
        %v2077 = vpop.permute.xlu0 %2076
        %v2079 = vsel %vm1290, %v2063, %v2069
        %vm2080 = vcmask 130048
        %v2081 = vsel %vm2080, %v2079, %v2073
        %vm2082 = vcmask 195584
        %v2083 = vsel %vm2082, %v2081, %v2077
        %v2084 = vld [vmem:[%s9] sm:$0xff]
        %v2085 = vld [vmem:[%s9 + $0x8] sm:$0xff]
        %v2086 = vld [vmem:[%s9 + $0x10] sm:$0xff]
        %v2087 = vld [vmem:[%s9 + $0x18] sm:$0xff]
        %v2088 = vld [vmem:[%s10] sm:$0x1]
        %v2090 = vlaneseq
        %v2091 = vshrl.u32 %v2090, 7
        %v2092 = vsub.s32 0, %v2091
        %v2093 = vrot.slane %v2088, %v2092
        %v2096 = vsel %vm775, %v2083, 0
        %2098 = vmatprep.subr.mxu0 0.0
        %2099 = vmatpush1.msra.mxu0 %v2084
        %2100 = vmatprep.subr.mxu0 0.0
        %2101 = vmatpush1.msra.mxu0 %v2085
        %2102 = vmatprep.subr.mxu0 0.0
        %2103 = vmatpush1.msra.mxu0 %v2086
        %2104 = vmatprep.subr.mxu0 0.0
        %2105 = vmatpush1.msra.mxu0 %v2087
        %2106 = vmatprep.subr.mxu0 0.0
        %2107 = vmatpush1.msra.mxu0 0.0
        %2108 = vmatprep.subr.mxu0 0.0
        %2109 = vmatpush1.msra.mxu0 0.0
        %2110 = vmatprep.subr.mxu0 0.0
        %2111 = vmatpush1.msra.mxu0 0.0
        %2112 = vmatprep.subr.mxu0 0.0
        %2113 = vmatpush1.msra.mxu0 0.0
        %2114 = vmatprep.subr.mxu0 0.0
        %2115 = vmatpush1.msra.mxu0 0.0
        %2116 = vmatprep.subr.mxu0 0.0
        %2117 = vmatpush1.msra.mxu0 0.0
        %2118 = vmatprep.subr.mxu0 0.0
        %2119 = vmatpush1.msra.mxu0 0.0
        %2120 = vmatprep.subr.mxu0 0.0
        %2121 = vmatpush1.msra.mxu0 0.0
        %2122 = vmatprep.subr.mxu0 0.0
        %2123 = vmatpush1.msra.mxu0 0.0
        %2124 = vmatprep.subr.mxu0 0.0
        %2125 = vmatpush1.msra.mxu0 0.0
        %2126 = vmatprep.subr.mxu0 0.0
        %2127 = vmatpush1.msra.mxu0 0.0
        %2128 = vmatprep.subr.mxu0 0.0
        %2129 = vmatpush1.msra.mxu0 0.0
        %2130 = vmatprep.subr.mxu0 0.0
        %2131 = vmatpush1.msra.mxu0 0.0
        %2132 = vmatprep.subr.mxu0 0.0
        %2133 = vmatpush1.msra.mxu0 0.0
        %2134 = vmatprep.subr.mxu0 0.0
        %2135 = vmatpush1.msra.mxu0 0.0
        %2136 = vmatprep.subr.mxu0 0.0
        %2137 = vmatpush1.msra.mxu0 0.0
        %2138 = vmatprep.subr.mxu0 0.0
        %2139 = vmatpush1.msra.mxu0 0.0
        %2140 = vmatprep.subr.mxu0 0.0
        %2141 = vmatpush1.msra.mxu0 0.0
        %2142 = vmatprep.subr.mxu0 0.0
        %2143 = vmatpush1.msra.mxu0 0.0
        %2144 = vmatprep.subr.mxu0 0.0
        %2145 = vmatpush1.msra.mxu0 0.0
        %2146 = vmatprep.subr.mxu0 0.0
        %2147 = vmatpush1.msra.mxu0 0.0
        %2148 = vmatprep.subr.mxu0 0.0
        %2149 = vmatpush1.msra.mxu0 0.0
        %2150 = vmatprep.subr.mxu0 0.0
        %2151 = vmatpush1.msra.mxu0 0.0
        %2152 = vmatprep.subr.mxu0 0.0
        %2153 = vmatpush1.msra.mxu0 0.0
        %2154 = vmatprep.subr.mxu0 0.0
        %2155 = vmatpush1.msra.mxu0 0.0
        %2156 = vmatprep.subr.mxu0 0.0
        %2157 = vmatpush1.msra.mxu0 0.0
        %2158 = vmatprep.subr.mxu0 0.0
        %2159 = vmatpush1.msra.mxu0 0.0
        %2160 = vmatprep.subr.mxu0 0.0
        %2161 = vmatpush1.msra.mxu0 0.0
        %2162 = vmatprep.mubr.f32.mxu0 0.0
        %2163 = vmatmul.mubr.f32.gmra.mrb[0].mxu0 %v2096
        %v2164 = vpop.f32.mrb[0].mxu0
        %v2165 = vadd.f32 %v2093, %v2164
        %v2166 = vpop.f32.mrb[0].mxu0
        %2167 = vdwg.mxu0
        %2168 = vst.msk [vmem:[%s578] sm:$0xff] %vm775, %v2165
        %v2169 = vrcp.pop %v1621
        %v2170 = vmul.f32 %v1612, %v2169
        %v2171 = vrcp.pop %v1624
        %v2172 = vmul.f32 %v1614, %v2171
        %v2173 = vrcp.pop %v1627
        %v2174 = vmul.f32 %v1616, %v2173
        %v2175 = vrcp.pop %v1630
        %v2176 = vmul.f32 %v1618, %v2175
        %2177 = vst.msk [vmem:[%s585] sm:$0xff] %vm1290, %v2170
        %2178 = vst.msk [vmem:[%s585 + $0x8] sm:$0xff] %vm1290, %v2172
        %2179 = vst.msk [vmem:[%s585 + $0x10] sm:$0xff] %vm1290, %v2174
        %2180 = vst.msk [vmem:[%s585 + $0x18] sm:$0xff] %vm1290, %v2176
        %s2181 = sand.u32 %s308, 1
        %s2182 = scalar_lea.sflag [#allocation6], %s2181
        %s2183 = sand.u32 %s308, 1
        %s2184 = smul.addr %s2183, 8
        %s2185 = scalar_lea.vmem [#allocation16], %s2184
        %s2186 = sand.u32 %s336, 1
        %s2187 = scalar_lea.sflag [#allocation18], %s2186
        %s2188 = sand.u32 %s336, 1
        %s2189 = smul.addr %s2188, 32
        %s2190 = scalar_lea.vmem [#allocation17], %s2189
        // Predicated region
        $region97: #{tpu_custom_call.1} parent=63 // pred_check
          %p2191 = pneg %p318
        $region98: #{tpu_custom_call.1} parent=63 // pred_check_branch
          %2193 = sbr.rel (%p2191) target = $region100
        $region99: #{tpu_custom_call.1} parent=63 // pred_region
          %s2195 = ssub.s32 128, 128
          %2196 = vsyncadd %s2182, %s2195
          %s2197 = sadd.s32 %s43, %s42
          %s2198 = smul.addr %s2197, 128
          %s2199 = scalar_lea.hbm %s11, %s2198
          %s2201 = sshll.u32 %s2185, 4
          %s2202 = int_to_ptr.vmem [resolvable:$true] %s2201
          %2204 = dma.vmem_to_hbm [thread:$0]  %s2202, 128, %s2199, %s2182
        $region100: #{tpu_custom_call.1} parent=63 // pred_fallthru
          _
        // Predicated region
        $region101: #{tpu_custom_call.1} parent=63 // pred_check
          %p2205 = pneg %p346
        $region102: #{tpu_custom_call.1} parent=63 // pred_check_branch
          %2207 = sbr.rel (%p2205) target = $region104
        $region103: #{tpu_custom_call.1} parent=63 // pred_region
          %s2209 = ssub.s32 512, 512
          %2210 = vsyncadd %s2187, %s2209
          %s2211 = smul.addr %s42, 4
          %s2212 = sadd.s32 %s43, %s2211
          %s2213 = smul.addr %s2212, 128
          %s2214 = scalar_lea.hbm %s12, %s2213
          %s2215 = sshll.u32 %s2190, 4
          %s2216 = int_to_ptr.vmem [resolvable:$true] %s2215
          %2221 = dma.vmem_to_hbm [thread:$0]  %s2216, 512, %s2214, %s2187, 128, 128, 8
        $region104: #{tpu_custom_call.1} parent=63 // pred_fallthru
          _
      $region64: #{tpu_custom_call.1} parent=5 // pred_fallthru
        _
      %p2222 = scmp.le.s32.totalorder 2, %s33
      // Predicated region
      $region105: #{tpu_custom_call.1} parent=5 // pred_check
        %p2223 = pneg %p2222
      $region106: #{tpu_custom_call.1} parent=5 // pred_check_branch
        %2225 = sbr.rel (%p2223) target = $region108
      $region107: #{tpu_custom_call.1} parent=5 // pred_region
        %s2226 = ssub.s32 %s33, 2
        // Predicated region
        $region109: #{tpu_custom_call.1} parent=107 // pred_check
          %p2227 = pneg %p324
        $region110: #{tpu_custom_call.1} parent=107 // pred_check_branch
          %2229 = sbr.rel (%p2227) target = $region112
        $region111: #{tpu_custom_call.1} parent=107 // pred_region
          %s2230 = sand.u32 %s309, 1
          %s2231 = scalar_lea.sflag [#allocation6], %s2230
          %s2232 = sand.u32 %s309, 1
          %s2233 = smul.addr %s2232, 8
          %s2234 = scalar_lea.vmem [#allocation16], %s2233
          %2235 = dma.done %s2231, 128
        $region112: #{tpu_custom_call.1} parent=107 // pred_fallthru
          _
        // Predicated region
        $region113: #{tpu_custom_call.1} parent=107 // pred_check
          %p2236 = pneg %p352
        $region114: #{tpu_custom_call.1} parent=107 // pred_check_branch
          %2238 = sbr.rel (%p2236) target = $region116
        $region115: #{tpu_custom_call.1} parent=107 // pred_region
          %s2239 = sand.u32 %s337, 1
          %s2240 = scalar_lea.sflag [#allocation18], %s2239
          %s2241 = sand.u32 %s337, 1
          %s2242 = smul.addr %s2241, 32
          %s2243 = scalar_lea.vmem [#allocation17], %s2242
          %2244 = dma.done %s2240, 512
        $region116: #{tpu_custom_call.1} parent=107 // pred_fallthru
          _
      $region108: #{tpu_custom_call.1} parent=5 // pred_fallthru
        _
    $region6: #{tpu_custom_call.1} parent=1 // loop_footer
      %s37 = sadd.s32 1, %s33
    $region7: #{tpu_custom_call.1} parent=1 // loop_footer_branch
      %32 = sbr.rel target = $region3
    $region8: #{tpu_custom_call.1} parent=1 // loop_exit
      _
    %2245 = vsyncpa [#allocation5], 1
    %s2246 = scalar_lea.sflag [#allocation5], 1
    %2247 = vsyncpa %s2246, 1
    %2248 = vsyncpa [#allocation8], 1
    %s2249 = scalar_lea.sflag [#allocation8], 1
    %2250 = vsyncpa %s2249, 1
    %2251 = vsyncpa [#allocation11], 1
    %2252 = vsyncpa [#allocation14], 1
    %2253 = vsyncpa [#allocation6], 1
    %s2254 = scalar_lea.sflag [#allocation6], 1
    %2255 = vsyncpa %s2254, 1
    %2256 = vsyncpa [#allocation18], 1
    %s2257 = scalar_lea.sflag [#allocation18], 1
    %2258 = vsyncpa %s2257, 1

</llo_original>
